<compile_context>
chip_gen: v7x
topology: tpu7x:2x2x1
jax: 0.10.0
libtpu: 0.0.40
codegen_flags: <defaults>
</compile_context>

<pallas_src>
import jax
import jax.numpy as jnp
from jax.experimental import pallas as pl
from jax.experimental.pallas import tpu as pltpu


def _round_up(x, m):
    return ((x + m - 1) // m) * m


def mlp_kernel(x_ref,
               w1_ref, b1_ref,
               w2_ref, b2_ref,
               w3_ref, b3_ref,
               w4_ref, b4_ref,
               o_ref):
    # One batch tile per grid step; all four layers fused (weights are VMEM-resident).
    h = x_ref[...]
    h = jnp.maximum(
        jnp.dot(h, w1_ref[...], preferred_element_type=jnp.float32) + b1_ref[...], 0.0)
    h = jnp.maximum(
        jnp.dot(h, w2_ref[...], preferred_element_type=jnp.float32) + b2_ref[...], 0.0)
    h = jnp.maximum(
        jnp.dot(h, w3_ref[...], preferred_element_type=jnp.float32) + b3_ref[...], 0.0)
    h = jnp.maximum(
        jnp.dot(h, w4_ref[...], preferred_element_type=jnp.float32) + b4_ref[...], 0.0)
    o_ref[...] = h.astype(o_ref.dtype)


def mlp_forward(img, params, *, batch_tile=256):
    """img: (B, C, H, W) float32. params: dict of w1..w4 (in,out) and b1..b4 (1,out)."""
    B = img.shape[0]
    x = img.reshape(B, -1).astype(jnp.float32)   # == torch.flatten(img, start_dim=1)
    K = x.shape[1]

    w1, b1 = params["w1"], params["b1"]
    w2, b2 = params["w2"], params["b2"]
    w3, b3 = params["w3"], params["b3"]
    w4, b4 = params["w4"], params["b4"]

    H = w1.shape[1]
    OUT = w4.shape[1]

    # Pad every feature dim to a multiple of 128 (lane-dense tiles, unmasked stores).
    K_p = _round_up(K, 128)
    H_p = _round_up(H, 128)
    O_p = _round_up(OUT, 128)

    # Batch tile: 256 rows (full MXU M on v6e/v7x) for large batches, otherwise the
    # smallest sublane-aligned tile that covers the batch.
    TB = min(batch_tile, _round_up(B, 8))
    B_p = _round_up(B, TB)

    def pad2(a, rows, cols):
        return jnp.pad(a, ((0, rows - a.shape[0]), (0, cols - a.shape[1])))

    x_p = pad2(x, B_p, K_p)
    w1p, b1p = pad2(w1, K_p, H_p), pad2(b1, 1, H_p)
    w2p, b2p = pad2(w2, H_p, H_p), pad2(b2, 1, H_p)
    w3p, b3p = pad2(w3, H_p, H_p), pad2(b3, 1, H_p)
    w4p, b4p = pad2(w4, H_p, O_p), pad2(b4, 1, O_p)

    grid = (B_p // TB,)

    def resident(shape):
        # Constant block index across the batch grid -> stays in VMEM, no re-DMA.
        return pl.BlockSpec(shape, lambda i: (0, 0))

    out_p = pl.pallas_call(
        mlp_kernel,
        out_shape=jax.ShapeDtypeStruct((B_p, O_p), jnp.float32),
        grid=grid,
        in_specs=[
            pl.BlockSpec((TB, K_p), lambda i: (i, 0)),   # batch tile of x (pipelined)
            resident(w1p.shape), resident(b1p.shape),
            resident(w2p.shape), resident(b2p.shape),
            resident(w3p.shape), resident(b3p.shape),
            resident(w4p.shape), resident(b4p.shape),
        ],
        out_specs=pl.BlockSpec((TB, O_p), lambda i: (i, 0)),
        compiler_params=pltpu.CompilerParams(
            dimension_semantics=("parallel",),   # v7x: shard batch tiles over 2 TCs
            vmem_limit_bytes=32 << 20,           # kernel needs only a few MiB; safe on v5e/v6e/v7x
        ),
    )(x_p, w1p, b1p, w2p, b2p, w3p, b3p, w4p, b4p)

    # Strip batch/feature padding back to the logical output.
    return out_p[:B, :OUT]


def init_params(key, input_size=28 * 28, hidden_size=400, output_size=10):
    """Deterministic init mimicking nn.Linear's U(-1/sqrt(fan_in), 1/sqrt(fan_in))."""
    sizes = [(input_size, hidden_size),
             (hidden_size, hidden_size),
             (hidden_size, hidden_size),
             (hidden_size, output_size)]
    params = {}
    for i, (fan_in, fan_out) in enumerate(sizes, start=1):
        key, kw, kb = jax.random.split(key, 3)
        bound = 1.0 / (fan_in ** 0.5)
        params[f"w{i}"] = jax.random.uniform(
            kw, (fan_in, fan_out), jnp.float32, minval=-bound, maxval=bound)
        params[f"b{i}"] = jax.random.uniform(
            kb, (1, fan_out), jnp.float32, minval=-bound, maxval=bound)
    return params


if __name__ == "__main__":
    key = jax.random.PRNGKey(0)
    k_img, k_params = jax.random.split(key)

    # Small batch of MNIST-shaped images (NCHW), consistent with input_size=28*28.
    img = jax.random.normal(k_img, (4, 1, 28, 28), jnp.float32)
    params = init_params(k_params)

    out = mlp_forward(img, params)
    out = jax.block_until_ready(out)

    # Sanity check against plain-JAX reference of the PyTorch forward.
    x = img.reshape(img.shape[0], -1)
    ref = x
    for i in range(1, 5):
        ref = jnp.maximum(ref @ params[f"w{i}"] + params[f"b{i}"], 0.0)
    assert out.shape == (4, 10)
    assert jnp.allclose(out, ref, atol=1e-4, rtol=1e-4)

    print("KERNEL_OK")
</pallas_src>

<mosaic_0001>
module attributes {stable_mosaic.version = 11 : i64} {
  func.func @mlp_kernel(%arg0: i32, %arg1: memref<8x896xf32, #tpu.memory_space<vmem>>, %arg2: memref<896x512xf32, #tpu.memory_space<vmem>>, %arg3: memref<1x512xf32, #tpu.memory_space<vmem>>, %arg4: memref<512x512xf32, #tpu.memory_space<vmem>>, %arg5: memref<1x512xf32, #tpu.memory_space<vmem>>, %arg6: memref<512x512xf32, #tpu.memory_space<vmem>>, %arg7: memref<1x512xf32, #tpu.memory_space<vmem>>, %arg8: memref<512x128xf32, #tpu.memory_space<vmem>>, %arg9: memref<1x128xf32, #tpu.memory_space<vmem>>, %arg10: memref<8x128xf32, #tpu.memory_space<vmem>>) attributes {dimension_semantics = [#tpu.dimension_semantics<parallel>], iteration_bounds = array<i64: 1>, scalar_prefetch = 0 : i64, scratch_operands = 0 : i64, tpu.core_type = #tpu.core_type<tc>, window_params = [{transform_indices = @transform_0, window_bounds = array<i64: 8, 896>}, {pipeline_mode = #tpu.pipeline_mode<synchronous>, transform_indices = @transform_1, window_bounds = array<i64: 896, 512>}, {pipeline_mode = #tpu.pipeline_mode<synchronous>, transform_indices = @transform_2, window_bounds = array<i64: 1, 512>}, {pipeline_mode = #tpu.pipeline_mode<synchronous>, transform_indices = @transform_3, window_bounds = array<i64: 512, 512>}, {pipeline_mode = #tpu.pipeline_mode<synchronous>, transform_indices = @transform_4, window_bounds = array<i64: 1, 512>}, {pipeline_mode = #tpu.pipeline_mode<synchronous>, transform_indices = @transform_5, window_bounds = array<i64: 512, 512>}, {pipeline_mode = #tpu.pipeline_mode<synchronous>, transform_indices = @transform_6, window_bounds = array<i64: 1, 512>}, {pipeline_mode = #tpu.pipeline_mode<synchronous>, transform_indices = @transform_7, window_bounds = array<i64: 512, 128>}, {pipeline_mode = #tpu.pipeline_mode<synchronous>, transform_indices = @transform_8, window_bounds = array<i64: 1, 128>}, {transform_indices = @transform_9, window_bounds = array<i64: 8, 128>}]} {
    %c0 = arith.constant 0 : index
    %c0_0 = arith.constant 0 : index
    %0 = vector.load %arg1[%c0, %c0_0] : memref<8x896xf32, #tpu.memory_space<vmem>>, vector<8x896xf32>
    %c0_1 = arith.constant 0 : index
    %c0_2 = arith.constant 0 : index
    %1 = vector.load %arg2[%c0_1, %c0_2] : memref<896x512xf32, #tpu.memory_space<vmem>>, vector<896x512xf32>
    %cst = arith.constant dense<0.000000e+00> : vector<8x512xf32>
    %2 = tpu.matmul %0, %1, %cst {dimension_numbers = #tpu.dot_dimension_numbers<[1], [0], [0], [1], [0, 0, 1, 1], [], []>} : vector<8x896xf32>, vector<896x512xf32>, vector<8x512xf32> -> vector<8x512xf32>
    %c0_3 = arith.constant 0 : index
    %c0_4 = arith.constant 0 : index
    %3 = vector.load %arg3[%c0_3, %c0_4] : memref<1x512xf32, #tpu.memory_space<vmem>>, vector<1x512xf32>
    %4 = vector.broadcast %3 : vector<1x512xf32> to vector<8x512xf32>
    %5 = arith.addf %2, %4 : vector<8x512xf32>
    %cst_5 = arith.constant 0.000000e+00 : f32
    %6 = vector.broadcast %cst_5 : f32 to vector<8x512xf32>
    %7 = arith.maximumf %5, %6 : vector<8x512xf32>
    %c0_6 = arith.constant 0 : index
    %c0_7 = arith.constant 0 : index
    %8 = vector.load %arg4[%c0_6, %c0_7] : memref<512x512xf32, #tpu.memory_space<vmem>>, vector<512x512xf32>
    %cst_8 = arith.constant dense<0.000000e+00> : vector<8x512xf32>
    %9 = tpu.matmul %7, %8, %cst_8 {dimension_numbers = #tpu.dot_dimension_numbers<[1], [0], [0], [1], [0, 0, 1, 1], [], []>} : vector<8x512xf32>, vector<512x512xf32>, vector<8x512xf32> -> vector<8x512xf32>
    %c0_9 = arith.constant 0 : index
    %c0_10 = arith.constant 0 : index
    %10 = vector.load %arg5[%c0_9, %c0_10] : memref<1x512xf32, #tpu.memory_space<vmem>>, vector<1x512xf32>
    %11 = vector.broadcast %10 : vector<1x512xf32> to vector<8x512xf32>
    %12 = arith.addf %9, %11 : vector<8x512xf32>
    %cst_11 = arith.constant 0.000000e+00 : f32
    %13 = vector.broadcast %cst_11 : f32 to vector<8x512xf32>
    %14 = arith.maximumf %12, %13 : vector<8x512xf32>
    %c0_12 = arith.constant 0 : index
    %c0_13 = arith.constant 0 : index
    %15 = vector.load %arg6[%c0_12, %c0_13] : memref<512x512xf32, #tpu.memory_space<vmem>>, vector<512x512xf32>
    %cst_14 = arith.constant dense<0.000000e+00> : vector<8x512xf32>
    %16 = tpu.matmul %14, %15, %cst_14 {dimension_numbers = #tpu.dot_dimension_numbers<[1], [0], [0], [1], [0, 0, 1, 1], [], []>} : vector<8x512xf32>, vector<512x512xf32>, vector<8x512xf32> -> vector<8x512xf32>
    %c0_15 = arith.constant 0 : index
    %c0_16 = arith.constant 0 : index
    %17 = vector.load %arg7[%c0_15, %c0_16] : memref<1x512xf32, #tpu.memory_space<vmem>>, vector<1x512xf32>
    %18 = vector.broadcast %17 : vector<1x512xf32> to vector<8x512xf32>
    %19 = arith.addf %16, %18 : vector<8x512xf32>
    %cst_17 = arith.constant 0.000000e+00 : f32
    %20 = vector.broadcast %cst_17 : f32 to vector<8x512xf32>
    %21 = arith.maximumf %19, %20 : vector<8x512xf32>
    %c0_18 = arith.constant 0 : index
    %c0_19 = arith.constant 0 : index
    %22 = vector.load %arg8[%c0_18, %c0_19] : memref<512x128xf32, #tpu.memory_space<vmem>>, vector<512x128xf32>
    %cst_20 = arith.constant dense<0.000000e+00> : vector<8x128xf32>
    %23 = tpu.matmul %21, %22, %cst_20 {dimension_numbers = #tpu.dot_dimension_numbers<[1], [0], [0], [1], [0, 0, 1, 1], [], []>} : vector<8x512xf32>, vector<512x128xf32>, vector<8x128xf32> -> vector<8x128xf32>
    %c0_21 = arith.constant 0 : index
    %c0_22 = arith.constant 0 : index
    %24 = vector.load %arg9[%c0_21, %c0_22] : memref<1x128xf32, #tpu.memory_space<vmem>>, vector<1x128xf32>
    %25 = vector.broadcast %24 : vector<1x128xf32> to vector<8x128xf32>
    %26 = arith.addf %23, %25 : vector<8x128xf32>
    %cst_23 = arith.constant 0.000000e+00 : f32
    %27 = vector.broadcast %cst_23 : f32 to vector<8x128xf32>
    %28 = arith.maximumf %26, %27 : vector<8x128xf32>
    %c0_24 = arith.constant 0 : index
    %c0_25 = arith.constant 0 : index
    %29 = vector.load %arg10[%c0_24, %c0_25] : memref<8x128xf32, #tpu.memory_space<vmem>>, vector<8x128xf32>
    tpu.vector_store %arg10[%c0_24, %c0_25], %28 {strides = array<i32>} : memref<8x128xf32, #tpu.memory_space<vmem>>, vector<8x128xf32>,
    return
  }
  func.func @transform_0(%arg0: i32) -> (i32, i32) {
    %c0_i32 = arith.constant 0 : i32
    %c0_i32_0 = arith.constant 0 : i32
    return %arg0, %c0_i32 : i32, i32
  }
  func.func @transform_1(%arg0: i32) -> (i32, i32) {
    %c0_i32 = arith.constant 0 : i32
    %c0_i32_0 = arith.constant 0 : i32
    %c0_i32_1 = arith.constant 0 : i32
    return %c0_i32, %c0_i32_0 : i32, i32
  }
  func.func @transform_2(%arg0: i32) -> (i32, i32) {
    %c0_i32 = arith.constant 0 : i32
    %c0_i32_0 = arith.constant 0 : i32
    %c0_i32_1 = arith.constant 0 : i32
    return %c0_i32, %c0_i32_0 : i32, i32
  }
  func.func @transform_3(%arg0: i32) -> (i32, i32) {
    %c0_i32 = arith.constant 0 : i32
    %c0_i32_0 = arith.constant 0 : i32
    %c0_i32_1 = arith.constant 0 : i32
    return %c0_i32, %c0_i32_0 : i32, i32
  }
  func.func @transform_4(%arg0: i32) -> (i32, i32) {
    %c0_i32 = arith.constant 0 : i32
    %c0_i32_0 = arith.constant 0 : i32
    %c0_i32_1 = arith.constant 0 : i32
    return %c0_i32, %c0_i32_0 : i32, i32
  }
  func.func @transform_5(%arg0: i32) -> (i32, i32) {
    %c0_i32 = arith.constant 0 : i32
    %c0_i32_0 = arith.constant 0 : i32
    %c0_i32_1 = arith.constant 0 : i32
    return %c0_i32, %c0_i32_0 : i32, i32
  }
  func.func @transform_6(%arg0: i32) -> (i32, i32) {
    %c0_i32 = arith.constant 0 : i32
    %c0_i32_0 = arith.constant 0 : i32
    %c0_i32_1 = arith.constant 0 : i32
    return %c0_i32, %c0_i32_0 : i32, i32
  }
  func.func @transform_7(%arg0: i32) -> (i32, i32) {
    %c0_i32 = arith.constant 0 : i32
    %c0_i32_0 = arith.constant 0 : i32
    %c0_i32_1 = arith.constant 0 : i32
    return %c0_i32, %c0_i32_0 : i32, i32
  }
  func.func @transform_8(%arg0: i32) -> (i32, i32) {
    %c0_i32 = arith.constant 0 : i32
    %c0_i32_0 = arith.constant 0 : i32
    %c0_i32_1 = arith.constant 0 : i32
    return %c0_i32, %c0_i32_0 : i32, i32
  }
  func.func @transform_9(%arg0: i32) -> (i32, i32) {
    %c0_i32 = arith.constant 0 : i32
    %c0_i32_0 = arith.constant 0 : i32
    return %arg0, %c0_i32 : i32, i32
  }
}

</mosaic_0001>

<llo_original>
// kernel: tpu_custom_call.1
$region0: #{tpu_custom_call.1}
  #allocation0 [shape = 'u32[]', space=smem, size = 0x4, offset = 0x4, fixed_abs, tag = 'smem constant byte address 0x4 - core index']
  #allocation1 [shape = 'u32[144,128]{1,0:T(1,128)}', space=vmem, size = 0x12000, scoped, tag = 'internal scratch']
  %s0 = inlined_call_operand.hbm [shape: f32[8,896], index: 0, kind: input, shape index: {}]
  %s1 = inlined_call_operand.hbm [shape: f32[896,512], index: 1, kind: input, shape index: {}]
  %s2 = inlined_call_operand.hbm [shape: f32[1,512], index: 2, kind: input, shape index: {}]
  %s3 = inlined_call_operand.hbm [shape: f32[512,512], index: 3, kind: input, shape index: {}]
  %s4 = inlined_call_operand.hbm [shape: f32[1,512], index: 4, kind: input, shape index: {}]
  %s5 = inlined_call_operand.hbm [shape: f32[512,512], index: 5, kind: input, shape index: {}]
  %s6 = inlined_call_operand.hbm [shape: f32[1,512], index: 6, kind: input, shape index: {}]
  %s7 = inlined_call_operand.hbm [shape: f32[512,128], index: 7, kind: input, shape index: {}]
  %s8 = inlined_call_operand.hbm [shape: f32[1,128], index: 8, kind: input, shape index: {}]
  %s9 = inlined_call_operand.hbm [shape: f32[8,128], index: 9, kind: output, shape index: {}]
  %s10 = sld [smem:[#allocation0]]
  $region82: #{tpu_custom_call.1} parent=0
    _
  %s12 = ssub.s32 1, %s10
  %s13 = scalar_select 0, %s12, %s10
  $region1: #{tpu_custom_call.1} parent=0
    #allocation2 [shape = 'u8[28672]{0}', space=vmem, size = 0x7000, scoped, tag = 'input window, operand 0, single buffered']
    #allocation3 [shape = 's32[1]{0}', space=sflag, size = 0x4, scoped, tag = 'scoped memory for tpu_custom_call.1']
    #allocation4 [shape = 's32[1]{0}', space=sflag, size = 0x4, scoped, tag = 'scoped memory for tpu_custom_call.1']
    #allocation5 [shape = 'u8[1835008]{0}', space=vmem, size = 0x1c0000, scoped, tag = 'input window, operand 1, single buffered']
    #allocation6 [shape = 's32[1]{0}', space=sflag, size = 0x4, scoped, tag = 'scoped memory for tpu_custom_call.1']
    #allocation7 [shape = 'u8[2048]{0}', space=vmem, size = 0x800, scoped, tag = 'input window, operand 2, single buffered']
    #allocation8 [shape = 'u8[1048576]{0}', space=vmem, size = 0x100000, scoped, tag = 'input window, operand 3, single buffered']
    #allocation9 [shape = 's32[1]{0}', space=sflag, size = 0x4, scoped, tag = 'scoped memory for tpu_custom_call.1']
    #allocation10 [shape = 'u8[2048]{0}', space=vmem, size = 0x800, scoped, tag = 'input window, operand 4, single buffered']
    #allocation11 [shape = 'u8[1048576]{0}', space=vmem, size = 0x100000, scoped, tag = 'input window, operand 5, single buffered']
    #allocation12 [shape = 's32[1]{0}', space=sflag, size = 0x4, scoped, tag = 'scoped memory for tpu_custom_call.1']
    #allocation13 [shape = 'u8[2048]{0}', space=vmem, size = 0x800, scoped, tag = 'input window, operand 6, single buffered']
    #allocation14 [shape = 'u8[262144]{0}', space=vmem, size = 0x40000, scoped, tag = 'input window, operand 7, single buffered']
    #allocation15 [shape = 's32[1]{0}', space=sflag, size = 0x4, scoped, tag = 'scoped memory for tpu_custom_call.1']
    #allocation16 [shape = 'u8[512]{0}', space=vmem, size = 0x400, scoped, tag = 'input window, operand 8, single buffered']
    #allocation17 [shape = 'u8[4096]{0}', space=vmem, size = 0x1000, scoped, tag = 'output window, operand 0, single buffered']
    %14 = vsyncpa [#allocation3], 0
    %15 = vsyncpa [#allocation6], 0
    %16 = vsyncpa [#allocation9], 0
    %17 = vsyncpa [#allocation12], 0
    %18 = vsyncpa [#allocation15], 0
    %19 = vsyncpa [#allocation4], 0
    // Predicated region
    $region2: #{tpu_custom_call.1} parent=1 // pred_check
      _
    $region3: #{tpu_custom_call.1} parent=1 // pred_check_branch
      %21 = sbr.rel (0) target = $region5
    $region4: #{tpu_custom_call.1} parent=1 // pred_region
      %s23 = ssub.s32 896, 896
      %24 = vsyncadd [#allocation3], %s23
      %s26 = sshll.u32 [#allocation2], 4
      %s27 = int_to_ptr.vmem [resolvable:$true] %s26
      %29 = dma.hbm_to_vmem [thread:$0]  %s0, 896, %s27, [#allocation3]
    $region5: #{tpu_custom_call.1} parent=1 // pred_fallthru
      _
    // Predicated region
    $region6: #{tpu_custom_call.1} parent=1 // pred_check
      _
    $region7: #{tpu_custom_call.1} parent=1 // pred_check_branch
      %31 = sbr.rel (0) target = $region9
    $region8: #{tpu_custom_call.1} parent=1 // pred_region
      %s33 = ssub.s32 57344, 57344
      %34 = vsyncadd [#allocation6], %s33
      %s35 = sshll.u32 [#allocation5], 4
      %s36 = int_to_ptr.vmem [resolvable:$true] %s35
      %41 = dma.hbm_to_vmem [thread:$0]  %s1, 57344, %s36, [#allocation6], 512, 512, 32
    $region9: #{tpu_custom_call.1} parent=1 // pred_fallthru
      _
    // Predicated region
    $region10: #{tpu_custom_call.1} parent=1 // pred_check
      _
    $region11: #{tpu_custom_call.1} parent=1 // pred_check_branch
      %43 = sbr.rel (0) target = $region13
    $region12: #{tpu_custom_call.1} parent=1 // pred_region
      %s45 = ssub.s32 64, 64
      %46 = vsyncadd [#allocation6], %s45
      %s48 = sshll.u32 [#allocation7], 4
      %s49 = int_to_ptr.vmem [resolvable:$true] %s48
      %51 = dma.hbm_to_vmem [thread:$0]  %s2, 64, %s49, [#allocation6]
    $region13: #{tpu_custom_call.1} parent=1 // pred_fallthru
      _
    // Predicated region
    $region14: #{tpu_custom_call.1} parent=1 // pred_check
      _
    $region15: #{tpu_custom_call.1} parent=1 // pred_check_branch
      %53 = sbr.rel (0) target = $region17
    $region16: #{tpu_custom_call.1} parent=1 // pred_region
      %s55 = ssub.s32 32768, 32768
      %56 = vsyncadd [#allocation9], %s55
      %s57 = sshll.u32 [#allocation8], 4
      %s58 = int_to_ptr.vmem [resolvable:$true] %s57
      %63 = dma.hbm_to_vmem [thread:$0]  %s3, 32768, %s58, [#allocation9], 512, 512, 32
    $region17: #{tpu_custom_call.1} parent=1 // pred_fallthru
      _
    // Predicated region
    $region18: #{tpu_custom_call.1} parent=1 // pred_check
      _
    $region19: #{tpu_custom_call.1} parent=1 // pred_check_branch
      %65 = sbr.rel (0) target = $region21
    $region20: #{tpu_custom_call.1} parent=1 // pred_region
      %s67 = ssub.s32 64, 64
      %68 = vsyncadd [#allocation9], %s67
      %s70 = sshll.u32 [#allocation10], 4
      %s71 = int_to_ptr.vmem [resolvable:$true] %s70
      %73 = dma.hbm_to_vmem [thread:$0]  %s4, 64, %s71, [#allocation9]
    $region21: #{tpu_custom_call.1} parent=1 // pred_fallthru
      _
    // Predicated region
    $region22: #{tpu_custom_call.1} parent=1 // pred_check
      _
    $region23: #{tpu_custom_call.1} parent=1 // pred_check_branch
      %75 = sbr.rel (0) target = $region25
    $region24: #{tpu_custom_call.1} parent=1 // pred_region
      %s77 = ssub.s32 32768, 32768
      %78 = vsyncadd [#allocation12], %s77
      %s79 = sshll.u32 [#allocation11], 4
      %s80 = int_to_ptr.vmem [resolvable:$true] %s79
      %85 = dma.hbm_to_vmem [thread:$0]  %s5, 32768, %s80, [#allocation12], 512, 512, 32
    $region25: #{tpu_custom_call.1} parent=1 // pred_fallthru
      _
    // Predicated region
    $region26: #{tpu_custom_call.1} parent=1 // pred_check
      _
    $region27: #{tpu_custom_call.1} parent=1 // pred_check_branch
      %87 = sbr.rel (0) target = $region29
    $region28: #{tpu_custom_call.1} parent=1 // pred_region
      %s89 = ssub.s32 64, 64
      %90 = vsyncadd [#allocation12], %s89
      %s92 = sshll.u32 [#allocation13], 4
      %s93 = int_to_ptr.vmem [resolvable:$true] %s92
      %95 = dma.hbm_to_vmem [thread:$0]  %s6, 64, %s93, [#allocation12]
    $region29: #{tpu_custom_call.1} parent=1 // pred_fallthru
      _
    // Predicated region
    $region30: #{tpu_custom_call.1} parent=1 // pred_check
      _
    $region31: #{tpu_custom_call.1} parent=1 // pred_check_branch
      %97 = sbr.rel (0) target = $region33
    $region32: #{tpu_custom_call.1} parent=1 // pred_region
      %s99 = ssub.s32 8192, 8192
      %100 = vsyncadd [#allocation15], %s99
      %s101 = sshll.u32 [#allocation14], 4
      %s102 = int_to_ptr.vmem [resolvable:$true] %s101
      %107 = dma.hbm_to_vmem [thread:$0]  %s7, 8192, %s102, [#allocation15], 128, 128, 8
    $region33: #{tpu_custom_call.1} parent=1 // pred_fallthru
      _
    // Predicated region
    $region34: #{tpu_custom_call.1} parent=1 // pred_check
      _
    $region35: #{tpu_custom_call.1} parent=1 // pred_check_branch
      %109 = sbr.rel (0) target = $region37
    $region36: #{tpu_custom_call.1} parent=1 // pred_region
      %s111 = ssub.s32 16, 16
      %112 = vsyncadd [#allocation15], %s111
      %s114 = sshll.u32 [#allocation16], 4
      %s115 = int_to_ptr.vmem [resolvable:$true] %s114
      %117 = dma.hbm_to_vmem [thread:$0]  %s8, 16, %s115, [#allocation15]
    $region37: #{tpu_custom_call.1} parent=1 // pred_fallthru
      _
    // Predicated region
    $region38: #{tpu_custom_call.1} parent=1 // pred_check
      _
    $region39: #{tpu_custom_call.1} parent=1 // pred_check_branch
      %119 = sbr.rel (0) target = $region41
    $region40: #{tpu_custom_call.1} parent=1 // pred_region
      %120 = dma.done [#allocation3], 896
    $region41: #{tpu_custom_call.1} parent=1 // pred_fallthru
      _
    // Predicated region
    $region42: #{tpu_custom_call.1} parent=1 // pred_check
      _
    $region43: #{tpu_custom_call.1} parent=1 // pred_check_branch
      %122 = sbr.rel (0) target = $region45
    $region44: #{tpu_custom_call.1} parent=1 // pred_region
      %123 = dma.done [#allocation6], 57344
    $region45: #{tpu_custom_call.1} parent=1 // pred_fallthru
      _
    // Predicated region
    $region46: #{tpu_custom_call.1} parent=1 // pred_check
      _
    $region47: #{tpu_custom_call.1} parent=1 // pred_check_branch
      %125 = sbr.rel (0) target = $region49
    $region48: #{tpu_custom_call.1} parent=1 // pred_region
      %126 = dma.done [#allocation6], 64
    $region49: #{tpu_custom_call.1} parent=1 // pred_fallthru
      _
    // Predicated region
    $region50: #{tpu_custom_call.1} parent=1 // pred_check
      _
    $region51: #{tpu_custom_call.1} parent=1 // pred_check_branch
      %128 = sbr.rel (0) target = $region53
    $region52: #{tpu_custom_call.1} parent=1 // pred_region
      %129 = dma.done [#allocation9], 32768
    $region53: #{tpu_custom_call.1} parent=1 // pred_fallthru
      _
    // Predicated region
    $region54: #{tpu_custom_call.1} parent=1 // pred_check
      _
    $region55: #{tpu_custom_call.1} parent=1 // pred_check_branch
      %131 = sbr.rel (0) target = $region57
    $region56: #{tpu_custom_call.1} parent=1 // pred_region
      %132 = dma.done [#allocation9], 64
    $region57: #{tpu_custom_call.1} parent=1 // pred_fallthru
      _
    // Predicated region
    $region58: #{tpu_custom_call.1} parent=1 // pred_check
      _
    $region59: #{tpu_custom_call.1} parent=1 // pred_check_branch
      %134 = sbr.rel (0) target = $region61
    $region60: #{tpu_custom_call.1} parent=1 // pred_region
      %135 = dma.done [#allocation12], 32768
    $region61: #{tpu_custom_call.1} parent=1 // pred_fallthru
      _
    // Predicated region
    $region62: #{tpu_custom_call.1} parent=1 // pred_check
      _
    $region63: #{tpu_custom_call.1} parent=1 // pred_check_branch
      %137 = sbr.rel (0) target = $region65
    $region64: #{tpu_custom_call.1} parent=1 // pred_region
      %138 = dma.done [#allocation12], 64
    $region65: #{tpu_custom_call.1} parent=1 // pred_fallthru
      _
    // Predicated region
    $region66: #{tpu_custom_call.1} parent=1 // pred_check
      _
    $region67: #{tpu_custom_call.1} parent=1 // pred_check_branch
      %140 = sbr.rel (0) target = $region69
    $region68: #{tpu_custom_call.1} parent=1 // pred_region
      %141 = dma.done [#allocation15], 8192
    $region69: #{tpu_custom_call.1} parent=1 // pred_fallthru
      _
    // Predicated region
    $region70: #{tpu_custom_call.1} parent=1 // pred_check
      _
    $region71: #{tpu_custom_call.1} parent=1 // pred_check_branch
      %143 = sbr.rel (0) target = $region73
    $region72: #{tpu_custom_call.1} parent=1 // pred_region
      %144 = dma.done [#allocation15], 16
    $region73: #{tpu_custom_call.1} parent=1 // pred_fallthru
      _
    %v145 = vld [vmem:[#allocation2] sm:$0xff]
    %v146 = vld [vmem:[#allocation2 + $0x8] sm:$0xff]
    %v147 = vld [vmem:[#allocation2 + $0x10] sm:$0xff]
    %v148 = vld [vmem:[#allocation2 + $0x18] sm:$0xff]
    %v149 = vld [vmem:[#allocation2 + $0x20] sm:$0xff]
    %v150 = vld [vmem:[#allocation2 + $0x28] sm:$0xff]
    %v151 = vld [vmem:[#allocation2 + $0x30] sm:$0xff]
    %v152 = vld [vmem:[#allocation5] sm:$0xff]
    %v153 = vld [vmem:[#allocation5 + $0x8] sm:$0xff]
    %v154 = vld [vmem:[#allocation5 + $0x10] sm:$0xff]
    %v155 = vld [vmem:[#allocation5 + $0x18] sm:$0xff]
    %v156 = vld [vmem:[#allocation5 + $0x20] sm:$0xff]
    %v157 = vld [vmem:[#allocation5 + $0x28] sm:$0xff]
    %v158 = vld [vmem:[#allocation5 + $0x30] sm:$0xff]
    %v159 = vld [vmem:[#allocation5 + $0x38] sm:$0xff]
    %v160 = vld [vmem:[#allocation5 + $0x40] sm:$0xff]
    %v161 = vld [vmem:[#allocation5 + $0x48] sm:$0xff]
    %v162 = vld [vmem:[#allocation5 + $0x50] sm:$0xff]
    %v163 = vld [vmem:[#allocation5 + $0x58] sm:$0xff]
    %v164 = vld [vmem:[#allocation5 + $0x60] sm:$0xff]
    %v165 = vld [vmem:[#allocation5 + $0x68] sm:$0xff]
    %v166 = vld [vmem:[#allocation5 + $0x70] sm:$0xff]
    %v167 = vld [vmem:[#allocation5 + $0x78] sm:$0xff]
    %v168 = vld [vmem:[#allocation5 + $0x80] sm:$0xff]
    %v169 = vld [vmem:[#allocation5 + $0x88] sm:$0xff]
    %v170 = vld [vmem:[#allocation5 + $0x90] sm:$0xff]
    %v171 = vld [vmem:[#allocation5 + $0x98] sm:$0xff]
    %v172 = vld [vmem:[#allocation5 + $0xa0] sm:$0xff]
    %v173 = vld [vmem:[#allocation5 + $0xa8] sm:$0xff]
    %v174 = vld [vmem:[#allocation5 + $0xb0] sm:$0xff]
    %v175 = vld [vmem:[#allocation5 + $0xb8] sm:$0xff]
    %v176 = vld [vmem:[#allocation5 + $0xc0] sm:$0xff]
    %v177 = vld [vmem:[#allocation5 + $0xc8] sm:$0xff]
    %v178 = vld [vmem:[#allocation5 + $0xd0] sm:$0xff]
    %v179 = vld [vmem:[#allocation5 + $0xd8] sm:$0xff]
    %v180 = vld [vmem:[#allocation5 + $0xe0] sm:$0xff]
    %v181 = vld [vmem:[#allocation5 + $0xe8] sm:$0xff]
    %v182 = vld [vmem:[#allocation5 + $0xf0] sm:$0xff]
    %v183 = vld [vmem:[#allocation5 + $0xf8] sm:$0xff]
    %v184 = vld [vmem:[#allocation5 + $0x100] sm:$0xff]
    %v185 = vld [vmem:[#allocation5 + $0x108] sm:$0xff]
    %v186 = vld [vmem:[#allocation5 + $0x110] sm:$0xff]
    %v187 = vld [vmem:[#allocation5 + $0x118] sm:$0xff]
    %v188 = vld [vmem:[#allocation5 + $0x120] sm:$0xff]
    %v189 = vld [vmem:[#allocation5 + $0x128] sm:$0xff]
    %v190 = vld [vmem:[#allocation5 + $0x130] sm:$0xff]
    %v191 = vld [vmem:[#allocation5 + $0x138] sm:$0xff]
    %v192 = vld [vmem:[#allocation5 + $0x140] sm:$0xff]
    %v193 = vld [vmem:[#allocation5 + $0x148] sm:$0xff]
    %v194 = vld [vmem:[#allocation5 + $0x150] sm:$0xff]
    %v195 = vld [vmem:[#allocation5 + $0x158] sm:$0xff]
    %v196 = vld [vmem:[#allocation5 + $0x160] sm:$0xff]
    %v197 = vld [vmem:[#allocation5 + $0x168] sm:$0xff]
    %v198 = vld [vmem:[#allocation5 + $0x170] sm:$0xff]
    %v199 = vld [vmem:[#allocation5 + $0x178] sm:$0xff]
    %v200 = vld [vmem:[#allocation5 + $0x180] sm:$0xff]
    %v201 = vld [vmem:[#allocation5 + $0x188] sm:$0xff]
    %v202 = vld [vmem:[#allocation5 + $0x190] sm:$0xff]
    %v203 = vld [vmem:[#allocation5 + $0x198] sm:$0xff]
    %v204 = vld [vmem:[#allocation5 + $0x1a0] sm:$0xff]
    %v205 = vld [vmem:[#allocation5 + $0x1a8] sm:$0xff]
    %v206 = vld [vmem:[#allocation5 + $0x1b0] sm:$0xff]
    %v207 = vld [vmem:[#allocation5 + $0x1b8] sm:$0xff]
    %v208 = vld [vmem:[#allocation5 + $0x1c0] sm:$0xff]
    %v209 = vld [vmem:[#allocation5 + $0x1c8] sm:$0xff]
    %v210 = vld [vmem:[#allocation5 + $0x1d0] sm:$0xff]
    %v211 = vld [vmem:[#allocation5 + $0x1d8] sm:$0xff]
    %v212 = vld [vmem:[#allocation5 + $0x1e0] sm:$0xff]
    %v213 = vld [vmem:[#allocation5 + $0x1e8] sm:$0xff]
    %v214 = vld [vmem:[#allocation5 + $0x1f0] sm:$0xff]
    %v215 = vld [vmem:[#allocation5 + $0x1f8] sm:$0xff]
    %v216 = vld [vmem:[#allocation5 + $0x200] sm:$0xff]
    %v217 = vld [vmem:[#allocation5 + $0x208] sm:$0xff]
    %v218 = vld [vmem:[#allocation5 + $0x210] sm:$0xff]
    %v219 = vld [vmem:[#allocation5 + $0x218] sm:$0xff]
    %v220 = vld [vmem:[#allocation5 + $0x220] sm:$0xff]
    %v221 = vld [vmem:[#allocation5 + $0x228] sm:$0xff]
    %v222 = vld [vmem:[#allocation5 + $0x230] sm:$0xff]
    %v223 = vld [vmem:[#allocation5 + $0x238] sm:$0xff]
    %v224 = vld [vmem:[#allocation5 + $0x240] sm:$0xff]
    %v225 = vld [vmem:[#allocation5 + $0x248] sm:$0xff]
    %v226 = vld [vmem:[#allocation5 + $0x250] sm:$0xff]
    %v227 = vld [vmem:[#allocation5 + $0x258] sm:$0xff]
    %v228 = vld [vmem:[#allocation5 + $0x260] sm:$0xff]
    %v229 = vld [vmem:[#allocation5 + $0x268] sm:$0xff]
    %v230 = vld [vmem:[#allocation5 + $0x270] sm:$0xff]
    %v231 = vld [vmem:[#allocation5 + $0x278] sm:$0xff]
    %v232 = vld [vmem:[#allocation5 + $0x280] sm:$0xff]
    %v233 = vld [vmem:[#allocation5 + $0x288] sm:$0xff]
    %v234 = vld [vmem:[#allocation5 + $0x290] sm:$0xff]
    %v235 = vld [vmem:[#allocation5 + $0x298] sm:$0xff]
    %v236 = vld [vmem:[#allocation5 + $0x2a0] sm:$0xff]
    %v237 = vld [vmem:[#allocation5 + $0x2a8] sm:$0xff]
    %v238 = vld [vmem:[#allocation5 + $0x2b0] sm:$0xff]
    %v239 = vld [vmem:[#allocation5 + $0x2b8] sm:$0xff]
    %v240 = vld [vmem:[#allocation5 + $0x2c0] sm:$0xff]
    %v241 = vld [vmem:[#allocation5 + $0x2c8] sm:$0xff]
    %v242 = vld [vmem:[#allocation5 + $0x2d0] sm:$0xff]
    %v243 = vld [vmem:[#allocation5 + $0x2d8] sm:$0xff]
    %v244 = vld [vmem:[#allocation5 + $0x2e0] sm:$0xff]
    %v245 = vld [vmem:[#allocation5 + $0x2e8] sm:$0xff]
    %v246 = vld [vmem:[#allocation5 + $0x2f0] sm:$0xff]
    %v247 = vld [vmem:[#allocation5 + $0x2f8] sm:$0xff]
    %v248 = vld [vmem:[#allocation5 + $0x300] sm:$0xff]
    %v249 = vld [vmem:[#allocation5 + $0x308] sm:$0xff]
    %v250 = vld [vmem:[#allocation5 + $0x310] sm:$0xff]
    %v251 = vld [vmem:[#allocation5 + $0x318] sm:$0xff]
    %v252 = vld [vmem:[#allocation5 + $0x320] sm:$0xff]
    %v253 = vld [vmem:[#allocation5 + $0x328] sm:$0xff]
    %v254 = vld [vmem:[#allocation5 + $0x330] sm:$0xff]
    %v255 = vld [vmem:[#allocation5 + $0x338] sm:$0xff]
    %v256 = vld [vmem:[#allocation5 + $0x340] sm:$0xff]
    %v257 = vld [vmem:[#allocation5 + $0x348] sm:$0xff]
    %v258 = vld [vmem:[#allocation5 + $0x350] sm:$0xff]
    %v259 = vld [vmem:[#allocation5 + $0x358] sm:$0xff]
    %v260 = vld [vmem:[#allocation5 + $0x360] sm:$0xff]
    %v261 = vld [vmem:[#allocation5 + $0x368] sm:$0xff]
    %v262 = vld [vmem:[#allocation5 + $0x370] sm:$0xff]
    %v263 = vld [vmem:[#allocation5 + $0x378] sm:$0xff]
    %v264 = vld [vmem:[#allocation5 + $0x380] sm:$0xff]
    %v265 = vld [vmem:[#allocation5 + $0x388] sm:$0xff]
    %v266 = vld [vmem:[#allocation5 + $0x390] sm:$0xff]
    %v267 = vld [vmem:[#allocation5 + $0x398] sm:$0xff]
    %v268 = vld [vmem:[#allocation5 + $0x3a0] sm:$0xff]
    %v269 = vld [vmem:[#allocation5 + $0x3a8] sm:$0xff]
    %v270 = vld [vmem:[#allocation5 + $0x3b0] sm:$0xff]
    %v271 = vld [vmem:[#allocation5 + $0x3b8] sm:$0xff]
    %v272 = vld [vmem:[#allocation5 + $0x3c0] sm:$0xff]
    %v273 = vld [vmem:[#allocation5 + $0x3c8] sm:$0xff]
    %v274 = vld [vmem:[#allocation5 + $0x3d0] sm:$0xff]
    %v275 = vld [vmem:[#allocation5 + $0x3d8] sm:$0xff]
    %v276 = vld [vmem:[#allocation5 + $0x3e0] sm:$0xff]
    %v277 = vld [vmem:[#allocation5 + $0x3e8] sm:$0xff]
    %v278 = vld [vmem:[#allocation5 + $0x3f0] sm:$0xff]
    %v279 = vld [vmem:[#allocation5 + $0x3f8] sm:$0xff]
    %v280 = vld [vmem:[#allocation5 + $0x400] sm:$0xff]
    %v281 = vld [vmem:[#allocation5 + $0x408] sm:$0xff]
    %v282 = vld [vmem:[#allocation5 + $0x410] sm:$0xff]
    %v283 = vld [vmem:[#allocation5 + $0x418] sm:$0xff]
    %v284 = vld [vmem:[#allocation5 + $0x420] sm:$0xff]
    %v285 = vld [vmem:[#allocation5 + $0x428] sm:$0xff]
    %v286 = vld [vmem:[#allocation5 + $0x430] sm:$0xff]
    %v287 = vld [vmem:[#allocation5 + $0x438] sm:$0xff]
    %v288 = vld [vmem:[#allocation5 + $0x440] sm:$0xff]
    %v289 = vld [vmem:[#allocation5 + $0x448] sm:$0xff]
    %v290 = vld [vmem:[#allocation5 + $0x450] sm:$0xff]
    %v291 = vld [vmem:[#allocation5 + $0x458] sm:$0xff]
    %v292 = vld [vmem:[#allocation5 + $0x460] sm:$0xff]
    %v293 = vld [vmem:[#allocation5 + $0x468] sm:$0xff]
    %v294 = vld [vmem:[#allocation5 + $0x470] sm:$0xff]
    %v295 = vld [vmem:[#allocation5 + $0x478] sm:$0xff]
    %v296 = vld [vmem:[#allocation5 + $0x480] sm:$0xff]
    %v297 = vld [vmem:[#allocation5 + $0x488] sm:$0xff]
    %v298 = vld [vmem:[#allocation5 + $0x490] sm:$0xff]
    %v299 = vld [vmem:[#allocation5 + $0x498] sm:$0xff]
    %v300 = vld [vmem:[#allocation5 + $0x4a0] sm:$0xff]
    %v301 = vld [vmem:[#allocation5 + $0x4a8] sm:$0xff]
    %v302 = vld [vmem:[#allocation5 + $0x4b0] sm:$0xff]
    %v303 = vld [vmem:[#allocation5 + $0x4b8] sm:$0xff]
    %v304 = vld [vmem:[#allocation5 + $0x4c0] sm:$0xff]
    %v305 = vld [vmem:[#allocation5 + $0x4c8] sm:$0xff]
    %v306 = vld [vmem:[#allocation5 + $0x4d0] sm:$0xff]
    %v307 = vld [vmem:[#allocation5 + $0x4d8] sm:$0xff]
    %v308 = vld [vmem:[#allocation5 + $0x4e0] sm:$0xff]
    %v309 = vld [vmem:[#allocation5 + $0x4e8] sm:$0xff]
    %v310 = vld [vmem:[#allocation5 + $0x4f0] sm:$0xff]
    %v311 = vld [vmem:[#allocation5 + $0x4f8] sm:$0xff]
    %v312 = vld [vmem:[#allocation5 + $0x500] sm:$0xff]
    %v313 = vld [vmem:[#allocation5 + $0x508] sm:$0xff]
    %v314 = vld [vmem:[#allocation5 + $0x510] sm:$0xff]
    %v315 = vld [vmem:[#allocation5 + $0x518] sm:$0xff]
    %v316 = vld [vmem:[#allocation5 + $0x520] sm:$0xff]
    %v317 = vld [vmem:[#allocation5 + $0x528] sm:$0xff]
    %v318 = vld [vmem:[#allocation5 + $0x530] sm:$0xff]
    %v319 = vld [vmem:[#allocation5 + $0x538] sm:$0xff]
    %v320 = vld [vmem:[#allocation5 + $0x540] sm:$0xff]
    %v321 = vld [vmem:[#allocation5 + $0x548] sm:$0xff]
    %v322 = vld [vmem:[#allocation5 + $0x550] sm:$0xff]
    %v323 = vld [vmem:[#allocation5 + $0x558] sm:$0xff]
    %v324 = vld [vmem:[#allocation5 + $0x560] sm:$0xff]
    %v325 = vld [vmem:[#allocation5 + $0x568] sm:$0xff]
    %v326 = vld [vmem:[#allocation5 + $0x570] sm:$0xff]
    %v327 = vld [vmem:[#allocation5 + $0x578] sm:$0xff]
    %v328 = vld [vmem:[#allocation5 + $0x580] sm:$0xff]
    %v329 = vld [vmem:[#allocation5 + $0x588] sm:$0xff]
    %v330 = vld [vmem:[#allocation5 + $0x590] sm:$0xff]
    %v331 = vld [vmem:[#allocation5 + $0x598] sm:$0xff]
    %v332 = vld [vmem:[#allocation5 + $0x5a0] sm:$0xff]
    %v333 = vld [vmem:[#allocation5 + $0x5a8] sm:$0xff]
    %v334 = vld [vmem:[#allocation5 + $0x5b0] sm:$0xff]
    %v335 = vld [vmem:[#allocation5 + $0x5b8] sm:$0xff]
    %v336 = vld [vmem:[#allocation5 + $0x5c0] sm:$0xff]
    %v337 = vld [vmem:[#allocation5 + $0x5c8] sm:$0xff]
    %v338 = vld [vmem:[#allocation5 + $0x5d0] sm:$0xff]
    %v339 = vld [vmem:[#allocation5 + $0x5d8] sm:$0xff]
    %v340 = vld [vmem:[#allocation5 + $0x5e0] sm:$0xff]
    %v341 = vld [vmem:[#allocation5 + $0x5e8] sm:$0xff]
    %v342 = vld [vmem:[#allocation5 + $0x5f0] sm:$0xff]
    %v343 = vld [vmem:[#allocation5 + $0x5f8] sm:$0xff]
    %v344 = vld [vmem:[#allocation5 + $0x600] sm:$0xff]
    %v345 = vld [vmem:[#allocation5 + $0x608] sm:$0xff]
    %v346 = vld [vmem:[#allocation5 + $0x610] sm:$0xff]
    %v347 = vld [vmem:[#allocation5 + $0x618] sm:$0xff]
    %v348 = vld [vmem:[#allocation5 + $0x620] sm:$0xff]
    %v349 = vld [vmem:[#allocation5 + $0x628] sm:$0xff]
    %v350 = vld [vmem:[#allocation5 + $0x630] sm:$0xff]
    %v351 = vld [vmem:[#allocation5 + $0x638] sm:$0xff]
    %v352 = vld [vmem:[#allocation5 + $0x640] sm:$0xff]
    %v353 = vld [vmem:[#allocation5 + $0x648] sm:$0xff]
    %v354 = vld [vmem:[#allocation5 + $0x650] sm:$0xff]
    %v355 = vld [vmem:[#allocation5 + $0x658] sm:$0xff]
    %v356 = vld [vmem:[#allocation5 + $0x660] sm:$0xff]
    %v357 = vld [vmem:[#allocation5 + $0x668] sm:$0xff]
    %v358 = vld [vmem:[#allocation5 + $0x670] sm:$0xff]
    %v359 = vld [vmem:[#allocation5 + $0x678] sm:$0xff]
    %v360 = vld [vmem:[#allocation5 + $0x680] sm:$0xff]
    %v361 = vld [vmem:[#allocation5 + $0x688] sm:$0xff]
    %v362 = vld [vmem:[#allocation5 + $0x690] sm:$0xff]
    %v363 = vld [vmem:[#allocation5 + $0x698] sm:$0xff]
    %v364 = vld [vmem:[#allocation5 + $0x6a0] sm:$0xff]
    %v365 = vld [vmem:[#allocation5 + $0x6a8] sm:$0xff]
    %v366 = vld [vmem:[#allocation5 + $0x6b0] sm:$0xff]
    %v367 = vld [vmem:[#allocation5 + $0x6b8] sm:$0xff]
    %v368 = vld [vmem:[#allocation5 + $0x6c0] sm:$0xff]
    %v369 = vld [vmem:[#allocation5 + $0x6c8] sm:$0xff]
    %v370 = vld [vmem:[#allocation5 + $0x6d0] sm:$0xff]
    %v371 = vld [vmem:[#allocation5 + $0x6d8] sm:$0xff]
    %v372 = vld [vmem:[#allocation5 + $0x6e0] sm:$0xff]
    %v373 = vld [vmem:[#allocation5 + $0x6e8] sm:$0xff]
    %v374 = vld [vmem:[#allocation5 + $0x6f0] sm:$0xff]
    %v375 = vld [vmem:[#allocation5 + $0x6f8] sm:$0xff]
    %v376 = vld [vmem:[#allocation5 + $0x700] sm:$0xff]
    %v377 = vld [vmem:[#allocation5 + $0x708] sm:$0xff]
    %v378 = vld [vmem:[#allocation5 + $0x710] sm:$0xff]
    %v379 = vld [vmem:[#allocation5 + $0x718] sm:$0xff]
    %v380 = vld [vmem:[#allocation5 + $0x720] sm:$0xff]
    %v381 = vld [vmem:[#allocation5 + $0x728] sm:$0xff]
    %v382 = vld [vmem:[#allocation5 + $0x730] sm:$0xff]
    %v383 = vld [vmem:[#allocation5 + $0x738] sm:$0xff]
    %v384 = vld [vmem:[#allocation5 + $0x740] sm:$0xff]
    %v385 = vld [vmem:[#allocation5 + $0x748] sm:$0xff]
    %v386 = vld [vmem:[#allocation5 + $0x750] sm:$0xff]
    %v387 = vld [vmem:[#allocation5 + $0x758] sm:$0xff]
    %v388 = vld [vmem:[#allocation5 + $0x760] sm:$0xff]
    %v389 = vld [vmem:[#allocation5 + $0x768] sm:$0xff]
    %v390 = vld [vmem:[#allocation5 + $0x770] sm:$0xff]
    %v391 = vld [vmem:[#allocation5 + $0x778] sm:$0xff]
    %v392 = vld [vmem:[#allocation5 + $0x780] sm:$0xff]
    %v393 = vld [vmem:[#allocation5 + $0x788] sm:$0xff]
    %v394 = vld [vmem:[#allocation5 + $0x790] sm:$0xff]
    %v395 = vld [vmem:[#allocation5 + $0x798] sm:$0xff]
    %v396 = vld [vmem:[#allocation5 + $0x7a0] sm:$0xff]
    %v397 = vld [vmem:[#allocation5 + $0x7a8] sm:$0xff]
    %v398 = vld [vmem:[#allocation5 + $0x7b0] sm:$0xff]
    %v399 = vld [vmem:[#allocation5 + $0x7b8] sm:$0xff]
    %v400 = vld [vmem:[#allocation5 + $0x7c0] sm:$0xff]
    %v401 = vld [vmem:[#allocation5 + $0x7c8] sm:$0xff]
    %v402 = vld [vmem:[#allocation5 + $0x7d0] sm:$0xff]
    %v403 = vld [vmem:[#allocation5 + $0x7d8] sm:$0xff]
    %v404 = vld [vmem:[#allocation5 + $0x7e0] sm:$0xff]
    %v405 = vld [vmem:[#allocation5 + $0x7e8] sm:$0xff]
    %v406 = vld [vmem:[#allocation5 + $0x7f0] sm:$0xff]
    %v407 = vld [vmem:[#allocation5 + $0x7f8] sm:$0xff]
    %v408 = vld [vmem:[#allocation5 + $0x800] sm:$0xff]
    %v409 = vld [vmem:[#allocation5 + $0x808] sm:$0xff]
    %v410 = vld [vmem:[#allocation5 + $0x810] sm:$0xff]
    %v411 = vld [vmem:[#allocation5 + $0x818] sm:$0xff]
    %v412 = vld [vmem:[#allocation5 + $0x820] sm:$0xff]
    %v413 = vld [vmem:[#allocation5 + $0x828] sm:$0xff]
    %v414 = vld [vmem:[#allocation5 + $0x830] sm:$0xff]
    %v415 = vld [vmem:[#allocation5 + $0x838] sm:$0xff]
    %v416 = vld [vmem:[#allocation5 + $0x840] sm:$0xff]
    %v417 = vld [vmem:[#allocation5 + $0x848] sm:$0xff]
    %v418 = vld [vmem:[#allocation5 + $0x850] sm:$0xff]
    %v419 = vld [vmem:[#allocation5 + $0x858] sm:$0xff]
    %v420 = vld [vmem:[#allocation5 + $0x860] sm:$0xff]
    %v421 = vld [vmem:[#allocation5 + $0x868] sm:$0xff]
    %v422 = vld [vmem:[#allocation5 + $0x870] sm:$0xff]
    %v423 = vld [vmem:[#allocation5 + $0x878] sm:$0xff]
    %v424 = vld [vmem:[#allocation5 + $0x880] sm:$0xff]
    %v425 = vld [vmem:[#allocation5 + $0x888] sm:$0xff]
    %v426 = vld [vmem:[#allocation5 + $0x890] sm:$0xff]
    %v427 = vld [vmem:[#allocation5 + $0x898] sm:$0xff]
    %v428 = vld [vmem:[#allocation5 + $0x8a0] sm:$0xff]
    %v429 = vld [vmem:[#allocation5 + $0x8a8] sm:$0xff]
    %v430 = vld [vmem:[#allocation5 + $0x8b0] sm:$0xff]
    %v431 = vld [vmem:[#allocation5 + $0x8b8] sm:$0xff]
    %v432 = vld [vmem:[#allocation5 + $0x8c0] sm:$0xff]
    %v433 = vld [vmem:[#allocation5 + $0x8c8] sm:$0xff]
    %v434 = vld [vmem:[#allocation5 + $0x8d0] sm:$0xff]
    %v435 = vld [vmem:[#allocation5 + $0x8d8] sm:$0xff]
    %v436 = vld [vmem:[#allocation5 + $0x8e0] sm:$0xff]
    %v437 = vld [vmem:[#allocation5 + $0x8e8] sm:$0xff]
    %v438 = vld [vmem:[#allocation5 + $0x8f0] sm:$0xff]
    %v439 = vld [vmem:[#allocation5 + $0x8f8] sm:$0xff]
    %v440 = vld [vmem:[#allocation5 + $0x900] sm:$0xff]
    %v441 = vld [vmem:[#allocation5 + $0x908] sm:$0xff]
    %v442 = vld [vmem:[#allocation5 + $0x910] sm:$0xff]
    %v443 = vld [vmem:[#allocation5 + $0x918] sm:$0xff]
    %v444 = vld [vmem:[#allocation5 + $0x920] sm:$0xff]
    %v445 = vld [vmem:[#allocation5 + $0x928] sm:$0xff]
    %v446 = vld [vmem:[#allocation5 + $0x930] sm:$0xff]
    %v447 = vld [vmem:[#allocation5 + $0x938] sm:$0xff]
    %v448 = vld [vmem:[#allocation5 + $0x940] sm:$0xff]
    %v449 = vld [vmem:[#allocation5 + $0x948] sm:$0xff]
    %v450 = vld [vmem:[#allocation5 + $0x950] sm:$0xff]
    %v451 = vld [vmem:[#allocation5 + $0x958] sm:$0xff]
    %v452 = vld [vmem:[#allocation5 + $0x960] sm:$0xff]
    %v453 = vld [vmem:[#allocation5 + $0x968] sm:$0xff]
    %v454 = vld [vmem:[#allocation5 + $0x970] sm:$0xff]
    %v455 = vld [vmem:[#allocation5 + $0x978] sm:$0xff]
    %v456 = vld [vmem:[#allocation5 + $0x980] sm:$0xff]
    %v457 = vld [vmem:[#allocation5 + $0x988] sm:$0xff]
    %v458 = vld [vmem:[#allocation5 + $0x990] sm:$0xff]
    %v459 = vld [vmem:[#allocation5 + $0x998] sm:$0xff]
    %v460 = vld [vmem:[#allocation5 + $0x9a0] sm:$0xff]
    %v461 = vld [vmem:[#allocation5 + $0x9a8] sm:$0xff]
    %v462 = vld [vmem:[#allocation5 + $0x9b0] sm:$0xff]
    %v463 = vld [vmem:[#allocation5 + $0x9b8] sm:$0xff]
    %v464 = vld [vmem:[#allocation5 + $0x9c0] sm:$0xff]
    %v465 = vld [vmem:[#allocation5 + $0x9c8] sm:$0xff]
    %v466 = vld [vmem:[#allocation5 + $0x9d0] sm:$0xff]
    %v467 = vld [vmem:[#allocation5 + $0x9d8] sm:$0xff]
    %v468 = vld [vmem:[#allocation5 + $0x9e0] sm:$0xff]
    %v469 = vld [vmem:[#allocation5 + $0x9e8] sm:$0xff]
    %v470 = vld [vmem:[#allocation5 + $0x9f0] sm:$0xff]
    %v471 = vld [vmem:[#allocation5 + $0x9f8] sm:$0xff]
    %v472 = vld [vmem:[#allocation5 + $0xa00] sm:$0xff]
    %v473 = vld [vmem:[#allocation5 + $0xa08] sm:$0xff]
    %v474 = vld [vmem:[#allocation5 + $0xa10] sm:$0xff]
    %v475 = vld [vmem:[#allocation5 + $0xa18] sm:$0xff]
    %v476 = vld [vmem:[#allocation5 + $0xa20] sm:$0xff]
    %v477 = vld [vmem:[#allocation5 + $0xa28] sm:$0xff]
    %v478 = vld [vmem:[#allocation5 + $0xa30] sm:$0xff]
    %v479 = vld [vmem:[#allocation5 + $0xa38] sm:$0xff]
    %v480 = vld [vmem:[#allocation5 + $0xa40] sm:$0xff]
    %v481 = vld [vmem:[#allocation5 + $0xa48] sm:$0xff]
    %v482 = vld [vmem:[#allocation5 + $0xa50] sm:$0xff]
    %v483 = vld [vmem:[#allocation5 + $0xa58] sm:$0xff]
    %v484 = vld [vmem:[#allocation5 + $0xa60] sm:$0xff]
    %v485 = vld [vmem:[#allocation5 + $0xa68] sm:$0xff]
    %v486 = vld [vmem:[#allocation5 + $0xa70] sm:$0xff]
    %v487 = vld [vmem:[#allocation5 + $0xa78] sm:$0xff]
    %v488 = vld [vmem:[#allocation5 + $0xa80] sm:$0xff]
    %v489 = vld [vmem:[#allocation5 + $0xa88] sm:$0xff]
    %v490 = vld [vmem:[#allocation5 + $0xa90] sm:$0xff]
    %v491 = vld [vmem:[#allocation5 + $0xa98] sm:$0xff]
    %v492 = vld [vmem:[#allocation5 + $0xaa0] sm:$0xff]
    %v493 = vld [vmem:[#allocation5 + $0xaa8] sm:$0xff]
    %v494 = vld [vmem:[#allocation5 + $0xab0] sm:$0xff]
    %v495 = vld [vmem:[#allocation5 + $0xab8] sm:$0xff]
    %v496 = vld [vmem:[#allocation5 + $0xac0] sm:$0xff]
    %v497 = vld [vmem:[#allocation5 + $0xac8] sm:$0xff]
    %v498 = vld [vmem:[#allocation5 + $0xad0] sm:$0xff]
    %v499 = vld [vmem:[#allocation5 + $0xad8] sm:$0xff]
    %v500 = vld [vmem:[#allocation5 + $0xae0] sm:$0xff]
    %v501 = vld [vmem:[#allocation5 + $0xae8] sm:$0xff]
    %v502 = vld [vmem:[#allocation5 + $0xaf0] sm:$0xff]
    %v503 = vld [vmem:[#allocation5 + $0xaf8] sm:$0xff]
    %v504 = vld [vmem:[#allocation5 + $0xb00] sm:$0xff]
    %v505 = vld [vmem:[#allocation5 + $0xb08] sm:$0xff]
    %v506 = vld [vmem:[#allocation5 + $0xb10] sm:$0xff]
    %v507 = vld [vmem:[#allocation5 + $0xb18] sm:$0xff]
    %v508 = vld [vmem:[#allocation5 + $0xb20] sm:$0xff]
    %v509 = vld [vmem:[#allocation5 + $0xb28] sm:$0xff]
    %v510 = vld [vmem:[#allocation5 + $0xb30] sm:$0xff]
    %v511 = vld [vmem:[#allocation5 + $0xb38] sm:$0xff]
    %v512 = vld [vmem:[#allocation5 + $0xb40] sm:$0xff]
    %v513 = vld [vmem:[#allocation5 + $0xb48] sm:$0xff]
    %v514 = vld [vmem:[#allocation5 + $0xb50] sm:$0xff]
    %v515 = vld [vmem:[#allocation5 + $0xb58] sm:$0xff]
    %v516 = vld [vmem:[#allocation5 + $0xb60] sm:$0xff]
    %v517 = vld [vmem:[#allocation5 + $0xb68] sm:$0xff]
    %v518 = vld [vmem:[#allocation5 + $0xb70] sm:$0xff]
    %v519 = vld [vmem:[#allocation5 + $0xb78] sm:$0xff]
    %v520 = vld [vmem:[#allocation5 + $0xb80] sm:$0xff]
    %v521 = vld [vmem:[#allocation5 + $0xb88] sm:$0xff]
    %v522 = vld [vmem:[#allocation5 + $0xb90] sm:$0xff]
    %v523 = vld [vmem:[#allocation5 + $0xb98] sm:$0xff]
    %v524 = vld [vmem:[#allocation5 + $0xba0] sm:$0xff]
    %v525 = vld [vmem:[#allocation5 + $0xba8] sm:$0xff]
    %v526 = vld [vmem:[#allocation5 + $0xbb0] sm:$0xff]
    %v527 = vld [vmem:[#allocation5 + $0xbb8] sm:$0xff]
    %v528 = vld [vmem:[#allocation5 + $0xbc0] sm:$0xff]
    %v529 = vld [vmem:[#allocation5 + $0xbc8] sm:$0xff]
    %v530 = vld [vmem:[#allocation5 + $0xbd0] sm:$0xff]
    %v531 = vld [vmem:[#allocation5 + $0xbd8] sm:$0xff]
    %v532 = vld [vmem:[#allocation5 + $0xbe0] sm:$0xff]
    %v533 = vld [vmem:[#allocation5 + $0xbe8] sm:$0xff]
    %v534 = vld [vmem:[#allocation5 + $0xbf0] sm:$0xff]
    %v535 = vld [vmem:[#allocation5 + $0xbf8] sm:$0xff]
    %v536 = vld [vmem:[#allocation5 + $0xc00] sm:$0xff]
    %v537 = vld [vmem:[#allocation5 + $0xc08] sm:$0xff]
    %v538 = vld [vmem:[#allocation5 + $0xc10] sm:$0xff]
    %v539 = vld [vmem:[#allocation5 + $0xc18] sm:$0xff]
    %v540 = vld [vmem:[#allocation5 + $0xc20] sm:$0xff]
    %v541 = vld [vmem:[#allocation5 + $0xc28] sm:$0xff]
    %v542 = vld [vmem:[#allocation5 + $0xc30] sm:$0xff]
    %v543 = vld [vmem:[#allocation5 + $0xc38] sm:$0xff]
    %v544 = vld [vmem:[#allocation5 + $0xc40] sm:$0xff]
    %v545 = vld [vmem:[#allocation5 + $0xc48] sm:$0xff]
    %v546 = vld [vmem:[#allocation5 + $0xc50] sm:$0xff]
    %v547 = vld [vmem:[#allocation5 + $0xc58] sm:$0xff]
    %v548 = vld [vmem:[#allocation5 + $0xc60] sm:$0xff]
    %v549 = vld [vmem:[#allocation5 + $0xc68] sm:$0xff]
    %v550 = vld [vmem:[#allocation5 + $0xc70] sm:$0xff]
    %v551 = vld [vmem:[#allocation5 + $0xc78] sm:$0xff]
    %v552 = vld [vmem:[#allocation5 + $0xc80] sm:$0xff]
    %v553 = vld [vmem:[#allocation5 + $0xc88] sm:$0xff]
    %v554 = vld [vmem:[#allocation5 + $0xc90] sm:$0xff]
    %v555 = vld [vmem:[#allocation5 + $0xc98] sm:$0xff]
    %v556 = vld [vmem:[#allocation5 + $0xca0] sm:$0xff]
    %v557 = vld [vmem:[#allocation5 + $0xca8] sm:$0xff]
    %v558 = vld [vmem:[#allocation5 + $0xcb0] sm:$0xff]
    %v559 = vld [vmem:[#allocation5 + $0xcb8] sm:$0xff]
    %v560 = vld [vmem:[#allocation5 + $0xcc0] sm:$0xff]
    %v561 = vld [vmem:[#allocation5 + $0xcc8] sm:$0xff]
    %v562 = vld [vmem:[#allocation5 + $0xcd0] sm:$0xff]
    %v563 = vld [vmem:[#allocation5 + $0xcd8] sm:$0xff]
    %v564 = vld [vmem:[#allocation5 + $0xce0] sm:$0xff]
    %v565 = vld [vmem:[#allocation5 + $0xce8] sm:$0xff]
    %v566 = vld [vmem:[#allocation5 + $0xcf0] sm:$0xff]
    %v567 = vld [vmem:[#allocation5 + $0xcf8] sm:$0xff]
    %v568 = vld [vmem:[#allocation5 + $0xd00] sm:$0xff]
    %v569 = vld [vmem:[#allocation5 + $0xd08] sm:$0xff]
    %v570 = vld [vmem:[#allocation5 + $0xd10] sm:$0xff]
    %v571 = vld [vmem:[#allocation5 + $0xd18] sm:$0xff]
    %v572 = vld [vmem:[#allocation5 + $0xd20] sm:$0xff]
    %v573 = vld [vmem:[#allocation5 + $0xd28] sm:$0xff]
    %v574 = vld [vmem:[#allocation5 + $0xd30] sm:$0xff]
    %v575 = vld [vmem:[#allocation5 + $0xd38] sm:$0xff]
    %v576 = vld [vmem:[#allocation5 + $0xd40] sm:$0xff]
    %v577 = vld [vmem:[#allocation5 + $0xd48] sm:$0xff]
    %v578 = vld [vmem:[#allocation5 + $0xd50] sm:$0xff]
    %v579 = vld [vmem:[#allocation5 + $0xd58] sm:$0xff]
    %v580 = vld [vmem:[#allocation5 + $0xd60] sm:$0xff]
    %v581 = vld [vmem:[#allocation5 + $0xd68] sm:$0xff]
    %v582 = vld [vmem:[#allocation5 + $0xd70] sm:$0xff]
    %v583 = vld [vmem:[#allocation5 + $0xd78] sm:$0xff]
    %v584 = vld [vmem:[#allocation5 + $0xd80] sm:$0xff]
    %v585 = vld [vmem:[#allocation5 + $0xd88] sm:$0xff]
    %v586 = vld [vmem:[#allocation5 + $0xd90] sm:$0xff]
    %v587 = vld [vmem:[#allocation5 + $0xd98] sm:$0xff]
    %v588 = vld [vmem:[#allocation5 + $0xda0] sm:$0xff]
    %v589 = vld [vmem:[#allocation5 + $0xda8] sm:$0xff]
    %v590 = vld [vmem:[#allocation5 + $0xdb0] sm:$0xff]
    %v591 = vld [vmem:[#allocation5 + $0xdb8] sm:$0xff]
    %v592 = vld [vmem:[#allocation5 + $0xdc0] sm:$0xff]
    %v593 = vld [vmem:[#allocation5 + $0xdc8] sm:$0xff]
    %v594 = vld [vmem:[#allocation5 + $0xdd0] sm:$0xff]
    %v595 = vld [vmem:[#allocation5 + $0xdd8] sm:$0xff]
    %v596 = vld [vmem:[#allocation5 + $0xde0] sm:$0xff]
    %v597 = vld [vmem:[#allocation5 + $0xde8] sm:$0xff]
    %v598 = vld [vmem:[#allocation5 + $0xdf0] sm:$0xff]
    %v599 = vld [vmem:[#allocation5 + $0xdf8] sm:$0xff]
    %v600 = vld [vmem:[#allocation7] sm:$0xf]
    %v602 = vlaneseq
    %v603 = vshrl.u32 %v602, 7
    %v604 = vsub.s32 0, %v603
    %v605 = vrot.slane %v600, %v604
    %v606 = vlaneseq
    %v607 = vshrl.u32 %v606, 7
    %v608 = vsub.s32 1, %v607
    %v609 = vrot.slane %v600, %v608
    %v610 = vlaneseq
    %v611 = vshrl.u32 %v610, 7
    %v612 = vsub.s32 2, %v611
    %v613 = vrot.slane %v600, %v612
    %v614 = vlaneseq
    %v615 = vshrl.u32 %v614, 7
    %v616 = vsub.s32 3, %v615
    %v617 = vrot.slane %v600, %v616
    %622 = vmatprep.subr.mxu0 %v153
    %623 = vmatpush1.msra.mxu0 %v152
    %624 = vmatprep.subr.mxu0 %v157
    %625 = vmatpush1.msra.mxu0 %v156
    %626 = vmatprep.subr.mxu0 %v161
    %627 = vmatpush1.msra.mxu0 %v160
    %628 = vmatprep.subr.mxu0 %v165
    %629 = vmatpush1.msra.mxu0 %v164
    %630 = vmatprep.subr.mxu0 %v169
    %631 = vmatpush1.msra.mxu0 %v168
    %632 = vmatprep.subr.mxu0 %v173
    %633 = vmatpush1.msra.mxu0 %v172
    %634 = vmatprep.subr.mxu0 %v177
    %635 = vmatpush1.msra.mxu0 %v176
    %636 = vmatprep.subr.mxu0 %v181
    %637 = vmatpush1.msra.mxu0 %v180
    %638 = vmatprep.subr.mxu0 %v185
    %639 = vmatpush1.msra.mxu0 %v184
    %640 = vmatprep.subr.mxu0 %v189
    %641 = vmatpush1.msra.mxu0 %v188
    %642 = vmatprep.subr.mxu0 %v193
    %643 = vmatpush1.msra.mxu0 %v192
    %644 = vmatprep.subr.mxu0 %v197
    %645 = vmatpush1.msra.mxu0 %v196
    %646 = vmatprep.subr.mxu0 %v201
    %647 = vmatpush1.msra.mxu0 %v200
    %648 = vmatprep.subr.mxu0 %v205
    %649 = vmatpush1.msra.mxu0 %v204
    %650 = vmatprep.subr.mxu0 %v209
    %651 = vmatpush1.msra.mxu0 %v208
    %652 = vmatprep.subr.mxu0 %v213
    %653 = vmatpush1.msra.mxu0 %v212
    %654 = vmatprep.subr.mxu0 %v217
    %655 = vmatpush1.msra.mxu0 %v216
    %656 = vmatprep.subr.mxu0 %v221
    %657 = vmatpush1.msra.mxu0 %v220
    %658 = vmatprep.subr.mxu0 %v225
    %659 = vmatpush1.msra.mxu0 %v224
    %660 = vmatprep.subr.mxu0 %v229
    %661 = vmatpush1.msra.mxu0 %v228
    %662 = vmatprep.subr.mxu0 %v233
    %663 = vmatpush1.msra.mxu0 %v232
    %664 = vmatprep.subr.mxu0 %v237
    %665 = vmatpush1.msra.mxu0 %v236
    %666 = vmatprep.subr.mxu0 %v241
    %667 = vmatpush1.msra.mxu0 %v240
    %668 = vmatprep.subr.mxu0 %v245
    %669 = vmatpush1.msra.mxu0 %v244
    %670 = vmatprep.subr.mxu0 %v249
    %671 = vmatpush1.msra.mxu0 %v248
    %672 = vmatprep.subr.mxu0 %v253
    %673 = vmatpush1.msra.mxu0 %v252
    %674 = vmatprep.subr.mxu0 %v257
    %675 = vmatpush1.msra.mxu0 %v256
    %676 = vmatprep.subr.mxu0 %v261
    %677 = vmatpush1.msra.mxu0 %v260
    %678 = vmatprep.subr.mxu0 %v265
    %679 = vmatpush1.msra.mxu0 %v264
    %680 = vmatprep.subr.mxu0 %v269
    %681 = vmatpush1.msra.mxu0 %v268
    %682 = vmatprep.subr.mxu0 %v273
    %683 = vmatpush1.msra.mxu0 %v272
    %684 = vmatprep.subr.mxu0 %v277
    %685 = vmatpush1.msra.mxu0 %v276
    %686 = vmatprep.mubr.f32.mxu0 %v146
    %687 = vmatmul.mubr.f32.gmra.mrb[0].mxu0 %v145
    %v688 = vpop.f32.mrb[0].mxu0
    %v689 = vadd.f32 %v605, %v688
    %v690 = vpop.f32.mrb[0].mxu0
    %v691 = vadd.f32 %v609, %v690
    %692 = vdwg.mxu0
    %693 = vmatprep.subr.mxu0 %v281
    %694 = vmatpush1.msra.mxu0 %v280
    %695 = vmatprep.subr.mxu0 %v285
    %696 = vmatpush1.msra.mxu0 %v284
    %697 = vmatprep.subr.mxu0 %v289
    %698 = vmatpush1.msra.mxu0 %v288
    %699 = vmatprep.subr.mxu0 %v293
    %700 = vmatpush1.msra.mxu0 %v292
    %701 = vmatprep.subr.mxu0 %v297
    %702 = vmatpush1.msra.mxu0 %v296
    %703 = vmatprep.subr.mxu0 %v301
    %704 = vmatpush1.msra.mxu0 %v300
    %705 = vmatprep.subr.mxu0 %v305
    %706 = vmatpush1.msra.mxu0 %v304
    %707 = vmatprep.subr.mxu0 %v309
    %708 = vmatpush1.msra.mxu0 %v308
    %709 = vmatprep.subr.mxu0 %v313
    %710 = vmatpush1.msra.mxu0 %v312
    %711 = vmatprep.subr.mxu0 %v317
    %712 = vmatpush1.msra.mxu0 %v316
    %713 = vmatprep.subr.mxu0 %v321
    %714 = vmatpush1.msra.mxu0 %v320
    %715 = vmatprep.subr.mxu0 %v325
    %716 = vmatpush1.msra.mxu0 %v324
    %717 = vmatprep.subr.mxu0 %v329
    %718 = vmatpush1.msra.mxu0 %v328
    %719 = vmatprep.subr.mxu0 %v333
    %720 = vmatpush1.msra.mxu0 %v332
    %721 = vmatprep.subr.mxu0 %v337
    %722 = vmatpush1.msra.mxu0 %v336
    %723 = vmatprep.subr.mxu0 %v341
    %724 = vmatpush1.msra.mxu0 %v340
    %725 = vmatprep.subr.mxu0 %v345
    %726 = vmatpush1.msra.mxu0 %v344
    %727 = vmatprep.subr.mxu0 %v349
    %728 = vmatpush1.msra.mxu0 %v348
    %729 = vmatprep.subr.mxu0 %v353
    %730 = vmatpush1.msra.mxu0 %v352
    %731 = vmatprep.subr.mxu0 %v357
    %732 = vmatpush1.msra.mxu0 %v356
    %733 = vmatprep.subr.mxu0 %v361
    %734 = vmatpush1.msra.mxu0 %v360
    %735 = vmatprep.subr.mxu0 %v365
    %736 = vmatpush1.msra.mxu0 %v364
    %737 = vmatprep.subr.mxu0 %v369
    %738 = vmatpush1.msra.mxu0 %v368
    %739 = vmatprep.subr.mxu0 %v373
    %740 = vmatpush1.msra.mxu0 %v372
    %741 = vmatprep.subr.mxu0 %v377
    %742 = vmatpush1.msra.mxu0 %v376
    %743 = vmatprep.subr.mxu0 %v381
    %744 = vmatpush1.msra.mxu0 %v380
    %745 = vmatprep.subr.mxu0 %v385
    %746 = vmatpush1.msra.mxu0 %v384
    %747 = vmatprep.subr.mxu0 %v389
    %748 = vmatpush1.msra.mxu0 %v388
    %749 = vmatprep.subr.mxu0 %v393
    %750 = vmatpush1.msra.mxu0 %v392
    %751 = vmatprep.subr.mxu0 %v397
    %752 = vmatpush1.msra.mxu0 %v396
    %753 = vmatprep.subr.mxu0 %v401
    %754 = vmatpush1.msra.mxu0 %v400
    %755 = vmatprep.subr.mxu0 %v405
    %756 = vmatpush1.msra.mxu0 %v404
    %757 = vmatprep.mubr.f32.mxu0 %v148
    %758 = vmatmul.mubr.f32.gmra.mrb[0].mxu0 %v147
    %v759 = vpop.f32.mrb[0].mxu0
    %v760 = vadd.f32 %v689, %v759
    %v761 = vpop.f32.mrb[0].mxu0
    %v762 = vadd.f32 %v691, %v761
    %763 = vdwg.mxu0
    %764 = vmatprep.subr.mxu0 %v409
    %765 = vmatpush1.msra.mxu0 %v408
    %766 = vmatprep.subr.mxu0 %v413
    %767 = vmatpush1.msra.mxu0 %v412
    %768 = vmatprep.subr.mxu0 %v417
    %769 = vmatpush1.msra.mxu0 %v416
    %770 = vmatprep.subr.mxu0 %v421
    %771 = vmatpush1.msra.mxu0 %v420
    %772 = vmatprep.subr.mxu0 %v425
    %773 = vmatpush1.msra.mxu0 %v424
    %774 = vmatprep.subr.mxu0 %v429
    %775 = vmatpush1.msra.mxu0 %v428
    %776 = vmatprep.subr.mxu0 %v433
    %777 = vmatpush1.msra.mxu0 %v432
    %778 = vmatprep.subr.mxu0 %v437
    %779 = vmatpush1.msra.mxu0 %v436
    %780 = vmatprep.subr.mxu0 %v441
    %781 = vmatpush1.msra.mxu0 %v440
    %782 = vmatprep.subr.mxu0 %v445
    %783 = vmatpush1.msra.mxu0 %v444
    %784 = vmatprep.subr.mxu0 %v449
    %785 = vmatpush1.msra.mxu0 %v448
    %786 = vmatprep.subr.mxu0 %v453
    %787 = vmatpush1.msra.mxu0 %v452
    %788 = vmatprep.subr.mxu0 %v457
    %789 = vmatpush1.msra.mxu0 %v456
    %790 = vmatprep.subr.mxu0 %v461
    %791 = vmatpush1.msra.mxu0 %v460
    %792 = vmatprep.subr.mxu0 %v465
    %793 = vmatpush1.msra.mxu0 %v464
    %794 = vmatprep.subr.mxu0 %v469
    %795 = vmatpush1.msra.mxu0 %v468
    %796 = vmatprep.subr.mxu0 %v473
    %797 = vmatpush1.msra.mxu0 %v472
    %798 = vmatprep.subr.mxu0 %v477
    %799 = vmatpush1.msra.mxu0 %v476
    %800 = vmatprep.subr.mxu0 %v481
    %801 = vmatpush1.msra.mxu0 %v480
    %802 = vmatprep.subr.mxu0 %v485
    %803 = vmatpush1.msra.mxu0 %v484
    %804 = vmatprep.subr.mxu0 %v489
    %805 = vmatpush1.msra.mxu0 %v488
    %806 = vmatprep.subr.mxu0 %v493
    %807 = vmatpush1.msra.mxu0 %v492
    %808 = vmatprep.subr.mxu0 %v497
    %809 = vmatpush1.msra.mxu0 %v496
    %810 = vmatprep.subr.mxu0 %v501
    %811 = vmatpush1.msra.mxu0 %v500
    %812 = vmatprep.subr.mxu0 %v505
    %813 = vmatpush1.msra.mxu0 %v504
    %814 = vmatprep.subr.mxu0 %v509
    %815 = vmatpush1.msra.mxu0 %v508
    %816 = vmatprep.subr.mxu0 %v513
    %817 = vmatpush1.msra.mxu0 %v512
    %818 = vmatprep.subr.mxu0 %v517
    %819 = vmatpush1.msra.mxu0 %v516
    %820 = vmatprep.subr.mxu0 %v521
    %821 = vmatpush1.msra.mxu0 %v520
    %822 = vmatprep.subr.mxu0 %v525
    %823 = vmatpush1.msra.mxu0 %v524
    %824 = vmatprep.subr.mxu0 %v529
    %825 = vmatpush1.msra.mxu0 %v528
    %826 = vmatprep.subr.mxu0 %v533
    %827 = vmatpush1.msra.mxu0 %v532
    %828 = vmatprep.mubr.f32.mxu0 %v150
    %829 = vmatmul.mubr.f32.gmra.mrb[0].mxu0 %v149
    %v830 = vpop.f32.mrb[0].mxu0
    %v831 = vadd.f32 %v760, %v830
    %v832 = vpop.f32.mrb[0].mxu0
    %v833 = vadd.f32 %v762, %v832
    %834 = vdwg.mxu0
    %835 = vmatprep.subr.mxu0 %v537
    %836 = vmatpush1.msra.mxu0 %v536
    %837 = vmatprep.subr.mxu0 %v541
    %838 = vmatpush1.msra.mxu0 %v540
    %839 = vmatprep.subr.mxu0 %v545
    %840 = vmatpush1.msra.mxu0 %v544
    %841 = vmatprep.subr.mxu0 %v549
    %842 = vmatpush1.msra.mxu0 %v548
    %843 = vmatprep.subr.mxu0 %v553
    %844 = vmatpush1.msra.mxu0 %v552
    %845 = vmatprep.subr.mxu0 %v557
    %846 = vmatpush1.msra.mxu0 %v556
    %847 = vmatprep.subr.mxu0 %v561
    %848 = vmatpush1.msra.mxu0 %v560
    %849 = vmatprep.subr.mxu0 %v565
    %850 = vmatpush1.msra.mxu0 %v564
    %851 = vmatprep.subr.mxu0 %v569
    %852 = vmatpush1.msra.mxu0 %v568
    %853 = vmatprep.subr.mxu0 %v573
    %854 = vmatpush1.msra.mxu0 %v572
    %855 = vmatprep.subr.mxu0 %v577
    %856 = vmatpush1.msra.mxu0 %v576
    %857 = vmatprep.subr.mxu0 %v581
    %858 = vmatpush1.msra.mxu0 %v580
    %859 = vmatprep.subr.mxu0 %v585
    %860 = vmatpush1.msra.mxu0 %v584
    %861 = vmatprep.subr.mxu0 %v589
    %862 = vmatpush1.msra.mxu0 %v588
    %863 = vmatprep.subr.mxu0 %v593
    %864 = vmatpush1.msra.mxu0 %v592
    %865 = vmatprep.subr.mxu0 %v597
    %866 = vmatpush1.msra.mxu0 %v596
    %867 = vmatprep.subr.mxu0 0.0
    %868 = vmatpush1.msra.mxu0 0.0
    %869 = vmatprep.subr.mxu0 0.0
    %870 = vmatpush1.msra.mxu0 0.0
    %871 = vmatprep.subr.mxu0 0.0
    %872 = vmatpush1.msra.mxu0 0.0
    %873 = vmatprep.subr.mxu0 0.0
    %874 = vmatpush1.msra.mxu0 0.0
    %875 = vmatprep.subr.mxu0 0.0
    %876 = vmatpush1.msra.mxu0 0.0
    %877 = vmatprep.subr.mxu0 0.0
    %878 = vmatpush1.msra.mxu0 0.0
    %879 = vmatprep.subr.mxu0 0.0
    %880 = vmatpush1.msra.mxu0 0.0
    %881 = vmatprep.subr.mxu0 0.0
    %882 = vmatpush1.msra.mxu0 0.0
    %883 = vmatprep.subr.mxu0 0.0
    %884 = vmatpush1.msra.mxu0 0.0
    %885 = vmatprep.subr.mxu0 0.0
    %886 = vmatpush1.msra.mxu0 0.0
    %887 = vmatprep.subr.mxu0 0.0
    %888 = vmatpush1.msra.mxu0 0.0
    %889 = vmatprep.subr.mxu0 0.0
    %890 = vmatpush1.msra.mxu0 0.0
    %891 = vmatprep.subr.mxu0 0.0
    %892 = vmatpush1.msra.mxu0 0.0
    %893 = vmatprep.subr.mxu0 0.0
    %894 = vmatpush1.msra.mxu0 0.0
    %895 = vmatprep.subr.mxu0 0.0
    %896 = vmatpush1.msra.mxu0 0.0
    %897 = vmatprep.subr.mxu0 0.0
    %898 = vmatpush1.msra.mxu0 0.0
    %899 = vmatprep.mubr.f32.mxu0 0.0
    %900 = vmatmul.mubr.f32.gmra.mrb[0].mxu0 %v151
    %v901 = vpop.f32.mrb[0].mxu0
    %v902 = vadd.f32 %v831, %v901
    %v903 = vpop.f32.mrb[0].mxu0
    %v904 = vadd.f32 %v833, %v903
    %905 = vdwg.mxu0
    %906 = vmatprep.subr.mxu0 %v155
    %907 = vmatpush1.msra.mxu0 %v154
    %908 = vmatprep.subr.mxu0 %v159
    %909 = vmatpush1.msra.mxu0 %v158
    %910 = vmatprep.subr.mxu0 %v163
    %911 = vmatpush1.msra.mxu0 %v162
    %912 = vmatprep.subr.mxu0 %v167
    %913 = vmatpush1.msra.mxu0 %v166
    %914 = vmatprep.subr.mxu0 %v171
    %915 = vmatpush1.msra.mxu0 %v170
    %916 = vmatprep.subr.mxu0 %v175
    %917 = vmatpush1.msra.mxu0 %v174
    %918 = vmatprep.subr.mxu0 %v179
    %919 = vmatpush1.msra.mxu0 %v178
    %920 = vmatprep.subr.mxu0 %v183
    %921 = vmatpush1.msra.mxu0 %v182
    %922 = vmatprep.subr.mxu0 %v187
    %923 = vmatpush1.msra.mxu0 %v186
    %924 = vmatprep.subr.mxu0 %v191
    %925 = vmatpush1.msra.mxu0 %v190
    %926 = vmatprep.subr.mxu0 %v195
    %927 = vmatpush1.msra.mxu0 %v194
    %928 = vmatprep.subr.mxu0 %v199
    %929 = vmatpush1.msra.mxu0 %v198
    %930 = vmatprep.subr.mxu0 %v203
    %931 = vmatpush1.msra.mxu0 %v202
    %932 = vmatprep.subr.mxu0 %v207
    %933 = vmatpush1.msra.mxu0 %v206
    %934 = vmatprep.subr.mxu0 %v211
    %935 = vmatpush1.msra.mxu0 %v210
    %936 = vmatprep.subr.mxu0 %v215
    %937 = vmatpush1.msra.mxu0 %v214
    %938 = vmatprep.subr.mxu0 %v219
    %939 = vmatpush1.msra.mxu0 %v218
    %940 = vmatprep.subr.mxu0 %v223
    %941 = vmatpush1.msra.mxu0 %v222
    %942 = vmatprep.subr.mxu0 %v227
    %943 = vmatpush1.msra.mxu0 %v226
    %944 = vmatprep.subr.mxu0 %v231
    %945 = vmatpush1.msra.mxu0 %v230
    %946 = vmatprep.subr.mxu0 %v235
    %947 = vmatpush1.msra.mxu0 %v234
    %948 = vmatprep.subr.mxu0 %v239
    %949 = vmatpush1.msra.mxu0 %v238
    %950 = vmatprep.subr.mxu0 %v243
    %951 = vmatpush1.msra.mxu0 %v242
    %952 = vmatprep.subr.mxu0 %v247
    %953 = vmatpush1.msra.mxu0 %v246
    %954 = vmatprep.subr.mxu0 %v251
    %955 = vmatpush1.msra.mxu0 %v250
    %956 = vmatprep.subr.mxu0 %v255
    %957 = vmatpush1.msra.mxu0 %v254
    %958 = vmatprep.subr.mxu0 %v259
    %959 = vmatpush1.msra.mxu0 %v258
    %960 = vmatprep.subr.mxu0 %v263
    %961 = vmatpush1.msra.mxu0 %v262
    %962 = vmatprep.subr.mxu0 %v267
    %963 = vmatpush1.msra.mxu0 %v266
    %964 = vmatprep.subr.mxu0 %v271
    %965 = vmatpush1.msra.mxu0 %v270
    %966 = vmatprep.subr.mxu0 %v275
    %967 = vmatpush1.msra.mxu0 %v274
    %968 = vmatprep.subr.mxu0 %v279
    %969 = vmatpush1.msra.mxu0 %v278
    %970 = vmatprep.mubr.f32.mxu0 %v146
    %971 = vmatmul.mubr.f32.gmra.mrb[0].mxu0 %v145
    %v972 = vpop.f32.mrb[0].mxu0
    %v973 = vadd.f32 %v613, %v972
    %v974 = vpop.f32.mrb[0].mxu0
    %v975 = vadd.f32 %v617, %v974
    %976 = vdwg.mxu0
    %977 = vmatprep.subr.mxu0 %v283
    %978 = vmatpush1.msra.mxu0 %v282
    %979 = vmatprep.subr.mxu0 %v287
    %980 = vmatpush1.msra.mxu0 %v286
    %981 = vmatprep.subr.mxu0 %v291
    %982 = vmatpush1.msra.mxu0 %v290
    %983 = vmatprep.subr.mxu0 %v295
    %984 = vmatpush1.msra.mxu0 %v294
    %985 = vmatprep.subr.mxu0 %v299
    %986 = vmatpush1.msra.mxu0 %v298
    %987 = vmatprep.subr.mxu0 %v303
    %988 = vmatpush1.msra.mxu0 %v302
    %989 = vmatprep.subr.mxu0 %v307
    %990 = vmatpush1.msra.mxu0 %v306
    %991 = vmatprep.subr.mxu0 %v311
    %992 = vmatpush1.msra.mxu0 %v310
    %993 = vmatprep.subr.mxu0 %v315
    %994 = vmatpush1.msra.mxu0 %v314
    %995 = vmatprep.subr.mxu0 %v319
    %996 = vmatpush1.msra.mxu0 %v318
    %997 = vmatprep.subr.mxu0 %v323
    %998 = vmatpush1.msra.mxu0 %v322
    %999 = vmatprep.subr.mxu0 %v327
    %1000 = vmatpush1.msra.mxu0 %v326
    %1001 = vmatprep.subr.mxu0 %v331
    %1002 = vmatpush1.msra.mxu0 %v330
    %1003 = vmatprep.subr.mxu0 %v335
    %1004 = vmatpush1.msra.mxu0 %v334
    %1005 = vmatprep.subr.mxu0 %v339
    %1006 = vmatpush1.msra.mxu0 %v338
    %1007 = vmatprep.subr.mxu0 %v343
    %1008 = vmatpush1.msra.mxu0 %v342
    %1009 = vmatprep.subr.mxu0 %v347
    %1010 = vmatpush1.msra.mxu0 %v346
    %1011 = vmatprep.subr.mxu0 %v351
    %1012 = vmatpush1.msra.mxu0 %v350
    %1013 = vmatprep.subr.mxu0 %v355
    %1014 = vmatpush1.msra.mxu0 %v354
    %1015 = vmatprep.subr.mxu0 %v359
    %1016 = vmatpush1.msra.mxu0 %v358
    %1017 = vmatprep.subr.mxu0 %v363
    %1018 = vmatpush1.msra.mxu0 %v362
    %1019 = vmatprep.subr.mxu0 %v367
    %1020 = vmatpush1.msra.mxu0 %v366
    %1021 = vmatprep.subr.mxu0 %v371
    %1022 = vmatpush1.msra.mxu0 %v370
    %1023 = vmatprep.subr.mxu0 %v375
    %1024 = vmatpush1.msra.mxu0 %v374
    %1025 = vmatprep.subr.mxu0 %v379
    %1026 = vmatpush1.msra.mxu0 %v378
    %1027 = vmatprep.subr.mxu0 %v383
    %1028 = vmatpush1.msra.mxu0 %v382
    %1029 = vmatprep.subr.mxu0 %v387
    %1030 = vmatpush1.msra.mxu0 %v386
    %1031 = vmatprep.subr.mxu0 %v391
    %1032 = vmatpush1.msra.mxu0 %v390
    %1033 = vmatprep.subr.mxu0 %v395
    %1034 = vmatpush1.msra.mxu0 %v394
    %1035 = vmatprep.subr.mxu0 %v399
    %1036 = vmatpush1.msra.mxu0 %v398
    %1037 = vmatprep.subr.mxu0 %v403
    %1038 = vmatpush1.msra.mxu0 %v402
    %1039 = vmatprep.subr.mxu0 %v407
    %1040 = vmatpush1.msra.mxu0 %v406
    %1041 = vmatprep.mubr.f32.mxu0 %v148
    %1042 = vmatmul.mubr.f32.gmra.mrb[0].mxu0 %v147
    %v1043 = vpop.f32.mrb[0].mxu0
    %v1044 = vadd.f32 %v973, %v1043
    %v1045 = vpop.f32.mrb[0].mxu0
    %v1046 = vadd.f32 %v975, %v1045
    %1047 = vdwg.mxu0
    %1048 = vmatprep.subr.mxu0 %v411
    %1049 = vmatpush1.msra.mxu0 %v410
    %1050 = vmatprep.subr.mxu0 %v415
    %1051 = vmatpush1.msra.mxu0 %v414
    %1052 = vmatprep.subr.mxu0 %v419
    %1053 = vmatpush1.msra.mxu0 %v418
    %1054 = vmatprep.subr.mxu0 %v423
    %1055 = vmatpush1.msra.mxu0 %v422
    %1056 = vmatprep.subr.mxu0 %v427
    %1057 = vmatpush1.msra.mxu0 %v426
    %1058 = vmatprep.subr.mxu0 %v431
    %1059 = vmatpush1.msra.mxu0 %v430
    %1060 = vmatprep.subr.mxu0 %v435
    %1061 = vmatpush1.msra.mxu0 %v434
    %1062 = vmatprep.subr.mxu0 %v439
    %1063 = vmatpush1.msra.mxu0 %v438
    %1064 = vmatprep.subr.mxu0 %v443
    %1065 = vmatpush1.msra.mxu0 %v442
    %1066 = vmatprep.subr.mxu0 %v447
    %1067 = vmatpush1.msra.mxu0 %v446
    %1068 = vmatprep.subr.mxu0 %v451
    %1069 = vmatpush1.msra.mxu0 %v450
    %1070 = vmatprep.subr.mxu0 %v455
    %1071 = vmatpush1.msra.mxu0 %v454
    %1072 = vmatprep.subr.mxu0 %v459
    %1073 = vmatpush1.msra.mxu0 %v458
    %1074 = vmatprep.subr.mxu0 %v463
    %1075 = vmatpush1.msra.mxu0 %v462
    %1076 = vmatprep.subr.mxu0 %v467
    %1077 = vmatpush1.msra.mxu0 %v466
    %1078 = vmatprep.subr.mxu0 %v471
    %1079 = vmatpush1.msra.mxu0 %v470
    %1080 = vmatprep.subr.mxu0 %v475
    %1081 = vmatpush1.msra.mxu0 %v474
    %1082 = vmatprep.subr.mxu0 %v479
    %1083 = vmatpush1.msra.mxu0 %v478
    %1084 = vmatprep.subr.mxu0 %v483
    %1085 = vmatpush1.msra.mxu0 %v482
    %1086 = vmatprep.subr.mxu0 %v487
    %1087 = vmatpush1.msra.mxu0 %v486
    %1088 = vmatprep.subr.mxu0 %v491
    %1089 = vmatpush1.msra.mxu0 %v490
    %1090 = vmatprep.subr.mxu0 %v495
    %1091 = vmatpush1.msra.mxu0 %v494
    %1092 = vmatprep.subr.mxu0 %v499
    %1093 = vmatpush1.msra.mxu0 %v498
    %1094 = vmatprep.subr.mxu0 %v503
    %1095 = vmatpush1.msra.mxu0 %v502
    %1096 = vmatprep.subr.mxu0 %v507
    %1097 = vmatpush1.msra.mxu0 %v506
    %1098 = vmatprep.subr.mxu0 %v511
    %1099 = vmatpush1.msra.mxu0 %v510
    %1100 = vmatprep.subr.mxu0 %v515
    %1101 = vmatpush1.msra.mxu0 %v514
    %1102 = vmatprep.subr.mxu0 %v519
    %1103 = vmatpush1.msra.mxu0 %v518
    %1104 = vmatprep.subr.mxu0 %v523
    %1105 = vmatpush1.msra.mxu0 %v522
    %1106 = vmatprep.subr.mxu0 %v527
    %1107 = vmatpush1.msra.mxu0 %v526
    %1108 = vmatprep.subr.mxu0 %v531
    %1109 = vmatpush1.msra.mxu0 %v530
    %1110 = vmatprep.subr.mxu0 %v535
    %1111 = vmatpush1.msra.mxu0 %v534
    %1112 = vmatprep.mubr.f32.mxu0 %v150
    %1113 = vmatmul.mubr.f32.gmra.mrb[0].mxu0 %v149
    %v1114 = vpop.f32.mrb[0].mxu0
    %v1115 = vadd.f32 %v1044, %v1114
    %v1116 = vpop.f32.mrb[0].mxu0
    %v1117 = vadd.f32 %v1046, %v1116
    %1118 = vdwg.mxu0
    %1119 = vmatprep.subr.mxu0 %v539
    %1120 = vmatpush1.msra.mxu0 %v538
    %1121 = vmatprep.subr.mxu0 %v543
    %1122 = vmatpush1.msra.mxu0 %v542
    %1123 = vmatprep.subr.mxu0 %v547
    %1124 = vmatpush1.msra.mxu0 %v546
    %1125 = vmatprep.subr.mxu0 %v551
    %1126 = vmatpush1.msra.mxu0 %v550
    %1127 = vmatprep.subr.mxu0 %v555
    %1128 = vmatpush1.msra.mxu0 %v554
    %1129 = vmatprep.subr.mxu0 %v559
    %1130 = vmatpush1.msra.mxu0 %v558
    %1131 = vmatprep.subr.mxu0 %v563
    %1132 = vmatpush1.msra.mxu0 %v562
    %1133 = vmatprep.subr.mxu0 %v567
    %1134 = vmatpush1.msra.mxu0 %v566
    %1135 = vmatprep.subr.mxu0 %v571
    %1136 = vmatpush1.msra.mxu0 %v570
    %1137 = vmatprep.subr.mxu0 %v575
    %1138 = vmatpush1.msra.mxu0 %v574
    %1139 = vmatprep.subr.mxu0 %v579
    %1140 = vmatpush1.msra.mxu0 %v578
    %1141 = vmatprep.subr.mxu0 %v583
    %1142 = vmatpush1.msra.mxu0 %v582
    %1143 = vmatprep.subr.mxu0 %v587
    %1144 = vmatpush1.msra.mxu0 %v586
    %1145 = vmatprep.subr.mxu0 %v591
    %1146 = vmatpush1.msra.mxu0 %v590
    %1147 = vmatprep.subr.mxu0 %v595
    %1148 = vmatpush1.msra.mxu0 %v594
    %1149 = vmatprep.subr.mxu0 %v599
    %1150 = vmatpush1.msra.mxu0 %v598
    %1151 = vmatprep.subr.mxu0 0.0
    %1152 = vmatpush1.msra.mxu0 0.0
    %1153 = vmatprep.subr.mxu0 0.0
    %1154 = vmatpush1.msra.mxu0 0.0
    %1155 = vmatprep.subr.mxu0 0.0
    %1156 = vmatpush1.msra.mxu0 0.0
    %1157 = vmatprep.subr.mxu0 0.0
    %1158 = vmatpush1.msra.mxu0 0.0
    %1159 = vmatprep.subr.mxu0 0.0
    %1160 = vmatpush1.msra.mxu0 0.0
    %1161 = vmatprep.subr.mxu0 0.0
    %1162 = vmatpush1.msra.mxu0 0.0
    %1163 = vmatprep.subr.mxu0 0.0
    %1164 = vmatpush1.msra.mxu0 0.0
    %1165 = vmatprep.subr.mxu0 0.0
    %1166 = vmatpush1.msra.mxu0 0.0
    %1167 = vmatprep.subr.mxu0 0.0
    %1168 = vmatpush1.msra.mxu0 0.0
    %1169 = vmatprep.subr.mxu0 0.0
    %1170 = vmatpush1.msra.mxu0 0.0
    %1171 = vmatprep.subr.mxu0 0.0
    %1172 = vmatpush1.msra.mxu0 0.0
    %1173 = vmatprep.subr.mxu0 0.0
    %1174 = vmatpush1.msra.mxu0 0.0
    %1175 = vmatprep.subr.mxu0 0.0
    %1176 = vmatpush1.msra.mxu0 0.0
    %1177 = vmatprep.subr.mxu0 0.0
    %1178 = vmatpush1.msra.mxu0 0.0
    %1179 = vmatprep.subr.mxu0 0.0
    %1180 = vmatpush1.msra.mxu0 0.0
    %1181 = vmatprep.subr.mxu0 0.0
    %1182 = vmatpush1.msra.mxu0 0.0
    %1183 = vmatprep.mubr.f32.mxu0 0.0
    %1184 = vmatmul.mubr.f32.gmra.mrb[0].mxu0 %v151
    %v1185 = vpop.f32.mrb[0].mxu0
    %v1186 = vadd.f32 %v1115, %v1185
    %v1187 = vpop.f32.mrb[0].mxu0
    %v1188 = vadd.f32 %v1117, %v1187
    %1189 = vdwg.mxu0
    %v1190 = vmax.f32 %v902, 0.0
    %v1191 = vmax.f32 %v904, 0.0
    %v1192 = vmax.f32 %v1186, 0.0
    %v1193 = vmax.f32 %v1188, 0.0
    %v1194 = vld [vmem:[#allocation8] sm:$0xff]
    %v1195 = vld [vmem:[#allocation8 + $0x8] sm:$0xff]
    %v1196 = vld [vmem:[#allocation8 + $0x10] sm:$0xff]
    %v1197 = vld [vmem:[#allocation8 + $0x18] sm:$0xff]
    %v1198 = vld [vmem:[#allocation8 + $0x20] sm:$0xff]
    %v1199 = vld [vmem:[#allocation8 + $0x28] sm:$0xff]
    %v1200 = vld [vmem:[#allocation8 + $0x30] sm:$0xff]
    %v1201 = vld [vmem:[#allocation8 + $0x38] sm:$0xff]
    %v1202 = vld [vmem:[#allocation8 + $0x40] sm:$0xff]
    %v1203 = vld [vmem:[#allocation8 + $0x48] sm:$0xff]
    %v1204 = vld [vmem:[#allocation8 + $0x50] sm:$0xff]
    %v1205 = vld [vmem:[#allocation8 + $0x58] sm:$0xff]
    %v1206 = vld [vmem:[#allocation8 + $0x60] sm:$0xff]
    %v1207 = vld [vmem:[#allocation8 + $0x68] sm:$0xff]
    %v1208 = vld [vmem:[#allocation8 + $0x70] sm:$0xff]
    %v1209 = vld [vmem:[#allocation8 + $0x78] sm:$0xff]
    %v1210 = vld [vmem:[#allocation8 + $0x80] sm:$0xff]
    %v1211 = vld [vmem:[#allocation8 + $0x88] sm:$0xff]
    %v1212 = vld [vmem:[#allocation8 + $0x90] sm:$0xff]
    %v1213 = vld [vmem:[#allocation8 + $0x98] sm:$0xff]
    %v1214 = vld [vmem:[#allocation8 + $0xa0] sm:$0xff]
    %v1215 = vld [vmem:[#allocation8 + $0xa8] sm:$0xff]
    %v1216 = vld [vmem:[#allocation8 + $0xb0] sm:$0xff]
    %v1217 = vld [vmem:[#allocation8 + $0xb8] sm:$0xff]
    %v1218 = vld [vmem:[#allocation8 + $0xc0] sm:$0xff]
    %v1219 = vld [vmem:[#allocation8 + $0xc8] sm:$0xff]
    %v1220 = vld [vmem:[#allocation8 + $0xd0] sm:$0xff]
    %v1221 = vld [vmem:[#allocation8 + $0xd8] sm:$0xff]
    %v1222 = vld [vmem:[#allocation8 + $0xe0] sm:$0xff]
    %v1223 = vld [vmem:[#allocation8 + $0xe8] sm:$0xff]
    %v1224 = vld [vmem:[#allocation8 + $0xf0] sm:$0xff]
    %v1225 = vld [vmem:[#allocation8 + $0xf8] sm:$0xff]
    %v1226 = vld [vmem:[#allocation8 + $0x100] sm:$0xff]
    %v1227 = vld [vmem:[#allocation8 + $0x108] sm:$0xff]
    %v1228 = vld [vmem:[#allocation8 + $0x110] sm:$0xff]
    %v1229 = vld [vmem:[#allocation8 + $0x118] sm:$0xff]
    %v1230 = vld [vmem:[#allocation8 + $0x120] sm:$0xff]
    %v1231 = vld [vmem:[#allocation8 + $0x128] sm:$0xff]
    %v1232 = vld [vmem:[#allocation8 + $0x130] sm:$0xff]
    %v1233 = vld [vmem:[#allocation8 + $0x138] sm:$0xff]
    %v1234 = vld [vmem:[#allocation8 + $0x140] sm:$0xff]
    %v1235 = vld [vmem:[#allocation8 + $0x148] sm:$0xff]
    %v1236 = vld [vmem:[#allocation8 + $0x150] sm:$0xff]
    %v1237 = vld [vmem:[#allocation8 + $0x158] sm:$0xff]
    %v1238 = vld [vmem:[#allocation8 + $0x160] sm:$0xff]
    %v1239 = vld [vmem:[#allocation8 + $0x168] sm:$0xff]
    %v1240 = vld [vmem:[#allocation8 + $0x170] sm:$0xff]
    %v1241 = vld [vmem:[#allocation8 + $0x178] sm:$0xff]
    %v1242 = vld [vmem:[#allocation8 + $0x180] sm:$0xff]
    %v1243 = vld [vmem:[#allocation8 + $0x188] sm:$0xff]
    %v1244 = vld [vmem:[#allocation8 + $0x190] sm:$0xff]
    %v1245 = vld [vmem:[#allocation8 + $0x198] sm:$0xff]
    %v1246 = vld [vmem:[#allocation8 + $0x1a0] sm:$0xff]
    %v1247 = vld [vmem:[#allocation8 + $0x1a8] sm:$0xff]
    %v1248 = vld [vmem:[#allocation8 + $0x1b0] sm:$0xff]
    %v1249 = vld [vmem:[#allocation8 + $0x1b8] sm:$0xff]
    %v1250 = vld [vmem:[#allocation8 + $0x1c0] sm:$0xff]
    %v1251 = vld [vmem:[#allocation8 + $0x1c8] sm:$0xff]
    %v1252 = vld [vmem:[#allocation8 + $0x1d0] sm:$0xff]
    %v1253 = vld [vmem:[#allocation8 + $0x1d8] sm:$0xff]
    %v1254 = vld [vmem:[#allocation8 + $0x1e0] sm:$0xff]
    %v1255 = vld [vmem:[#allocation8 + $0x1e8] sm:$0xff]
    %v1256 = vld [vmem:[#allocation8 + $0x1f0] sm:$0xff]
    %v1257 = vld [vmem:[#allocation8 + $0x1f8] sm:$0xff]
    %v1258 = vld [vmem:[#allocation8 + $0x200] sm:$0xff]
    %v1259 = vld [vmem:[#allocation8 + $0x208] sm:$0xff]
    %v1260 = vld [vmem:[#allocation8 + $0x210] sm:$0xff]
    %v1261 = vld [vmem:[#allocation8 + $0x218] sm:$0xff]
    %v1262 = vld [vmem:[#allocation8 + $0x220] sm:$0xff]
    %v1263 = vld [vmem:[#allocation8 + $0x228] sm:$0xff]
    %v1264 = vld [vmem:[#allocation8 + $0x230] sm:$0xff]
    %v1265 = vld [vmem:[#allocation8 + $0x238] sm:$0xff]
    %v1266 = vld [vmem:[#allocation8 + $0x240] sm:$0xff]
    %v1267 = vld [vmem:[#allocation8 + $0x248] sm:$0xff]
    %v1268 = vld [vmem:[#allocation8 + $0x250] sm:$0xff]
    %v1269 = vld [vmem:[#allocation8 + $0x258] sm:$0xff]
    %v1270 = vld [vmem:[#allocation8 + $0x260] sm:$0xff]
    %v1271 = vld [vmem:[#allocation8 + $0x268] sm:$0xff]
    %v1272 = vld [vmem:[#allocation8 + $0x270] sm:$0xff]
    %v1273 = vld [vmem:[#allocation8 + $0x278] sm:$0xff]
    %v1274 = vld [vmem:[#allocation8 + $0x280] sm:$0xff]
    %v1275 = vld [vmem:[#allocation8 + $0x288] sm:$0xff]
    %v1276 = vld [vmem:[#allocation8 + $0x290] sm:$0xff]
    %v1277 = vld [vmem:[#allocation8 + $0x298] sm:$0xff]
    %v1278 = vld [vmem:[#allocation8 + $0x2a0] sm:$0xff]
    %v1279 = vld [vmem:[#allocation8 + $0x2a8] sm:$0xff]
    %v1280 = vld [vmem:[#allocation8 + $0x2b0] sm:$0xff]
    %v1281 = vld [vmem:[#allocation8 + $0x2b8] sm:$0xff]
    %v1282 = vld [vmem:[#allocation8 + $0x2c0] sm:$0xff]
    %v1283 = vld [vmem:[#allocation8 + $0x2c8] sm:$0xff]
    %v1284 = vld [vmem:[#allocation8 + $0x2d0] sm:$0xff]
    %v1285 = vld [vmem:[#allocation8 + $0x2d8] sm:$0xff]
    %v1286 = vld [vmem:[#allocation8 + $0x2e0] sm:$0xff]
    %v1287 = vld [vmem:[#allocation8 + $0x2e8] sm:$0xff]
    %v1288 = vld [vmem:[#allocation8 + $0x2f0] sm:$0xff]
    %v1289 = vld [vmem:[#allocation8 + $0x2f8] sm:$0xff]
    %v1290 = vld [vmem:[#allocation8 + $0x300] sm:$0xff]
    %v1291 = vld [vmem:[#allocation8 + $0x308] sm:$0xff]
    %v1292 = vld [vmem:[#allocation8 + $0x310] sm:$0xff]
    %v1293 = vld [vmem:[#allocation8 + $0x318] sm:$0xff]
    %v1294 = vld [vmem:[#allocation8 + $0x320] sm:$0xff]
    %v1295 = vld [vmem:[#allocation8 + $0x328] sm:$0xff]
    %v1296 = vld [vmem:[#allocation8 + $0x330] sm:$0xff]
    %v1297 = vld [vmem:[#allocation8 + $0x338] sm:$0xff]
    %v1298 = vld [vmem:[#allocation8 + $0x340] sm:$0xff]
    %v1299 = vld [vmem:[#allocation8 + $0x348] sm:$0xff]
    %v1300 = vld [vmem:[#allocation8 + $0x350] sm:$0xff]
    %v1301 = vld [vmem:[#allocation8 + $0x358] sm:$0xff]
    %v1302 = vld [vmem:[#allocation8 + $0x360] sm:$0xff]
    %v1303 = vld [vmem:[#allocation8 + $0x368] sm:$0xff]
    %v1304 = vld [vmem:[#allocation8 + $0x370] sm:$0xff]
    %v1305 = vld [vmem:[#allocation8 + $0x378] sm:$0xff]
    %v1306 = vld [vmem:[#allocation8 + $0x380] sm:$0xff]
    %v1307 = vld [vmem:[#allocation8 + $0x388] sm:$0xff]
    %v1308 = vld [vmem:[#allocation8 + $0x390] sm:$0xff]
    %v1309 = vld [vmem:[#allocation8 + $0x398] sm:$0xff]
    %v1310 = vld [vmem:[#allocation8 + $0x3a0] sm:$0xff]
    %v1311 = vld [vmem:[#allocation8 + $0x3a8] sm:$0xff]
    %v1312 = vld [vmem:[#allocation8 + $0x3b0] sm:$0xff]
    %v1313 = vld [vmem:[#allocation8 + $0x3b8] sm:$0xff]
    %v1314 = vld [vmem:[#allocation8 + $0x3c0] sm:$0xff]
    %v1315 = vld [vmem:[#allocation8 + $0x3c8] sm:$0xff]
    %v1316 = vld [vmem:[#allocation8 + $0x3d0] sm:$0xff]
    %v1317 = vld [vmem:[#allocation8 + $0x3d8] sm:$0xff]
    %v1318 = vld [vmem:[#allocation8 + $0x3e0] sm:$0xff]
    %v1319 = vld [vmem:[#allocation8 + $0x3e8] sm:$0xff]
    %v1320 = vld [vmem:[#allocation8 + $0x3f0] sm:$0xff]
    %v1321 = vld [vmem:[#allocation8 + $0x3f8] sm:$0xff]
    %v1322 = vld [vmem:[#allocation8 + $0x400] sm:$0xff]
    %v1323 = vld [vmem:[#allocation8 + $0x408] sm:$0xff]
    %v1324 = vld [vmem:[#allocation8 + $0x410] sm:$0xff]
    %v1325 = vld [vmem:[#allocation8 + $0x418] sm:$0xff]
    %v1326 = vld [vmem:[#allocation8 + $0x420] sm:$0xff]
    %v1327 = vld [vmem:[#allocation8 + $0x428] sm:$0xff]
    %v1328 = vld [vmem:[#allocation8 + $0x430] sm:$0xff]
    %v1329 = vld [vmem:[#allocation8 + $0x438] sm:$0xff]
    %v1330 = vld [vmem:[#allocation8 + $0x440] sm:$0xff]
    %v1331 = vld [vmem:[#allocation8 + $0x448] sm:$0xff]
    %v1332 = vld [vmem:[#allocation8 + $0x450] sm:$0xff]
    %v1333 = vld [vmem:[#allocation8 + $0x458] sm:$0xff]
    %v1334 = vld [vmem:[#allocation8 + $0x460] sm:$0xff]
    %v1335 = vld [vmem:[#allocation8 + $0x468] sm:$0xff]
    %v1336 = vld [vmem:[#allocation8 + $0x470] sm:$0xff]
    %v1337 = vld [vmem:[#allocation8 + $0x478] sm:$0xff]
    %v1338 = vld [vmem:[#allocation8 + $0x480] sm:$0xff]
    %v1339 = vld [vmem:[#allocation8 + $0x488] sm:$0xff]
    %v1340 = vld [vmem:[#allocation8 + $0x490] sm:$0xff]
    %v1341 = vld [vmem:[#allocation8 + $0x498] sm:$0xff]
    %v1342 = vld [vmem:[#allocation8 + $0x4a0] sm:$0xff]
    %v1343 = vld [vmem:[#allocation8 + $0x4a8] sm:$0xff]
    %v1344 = vld [vmem:[#allocation8 + $0x4b0] sm:$0xff]
    %v1345 = vld [vmem:[#allocation8 + $0x4b8] sm:$0xff]
    %v1346 = vld [vmem:[#allocation8 + $0x4c0] sm:$0xff]
    %v1347 = vld [vmem:[#allocation8 + $0x4c8] sm:$0xff]
    %v1348 = vld [vmem:[#allocation8 + $0x4d0] sm:$0xff]
    %v1349 = vld [vmem:[#allocation8 + $0x4d8] sm:$0xff]
    %v1350 = vld [vmem:[#allocation8 + $0x4e0] sm:$0xff]
    %v1351 = vld [vmem:[#allocation8 + $0x4e8] sm:$0xff]
    %v1352 = vld [vmem:[#allocation8 + $0x4f0] sm:$0xff]
    %v1353 = vld [vmem:[#allocation8 + $0x4f8] sm:$0xff]
    %v1354 = vld [vmem:[#allocation8 + $0x500] sm:$0xff]
    %v1355 = vld [vmem:[#allocation8 + $0x508] sm:$0xff]
    %v1356 = vld [vmem:[#allocation8 + $0x510] sm:$0xff]
    %v1357 = vld [vmem:[#allocation8 + $0x518] sm:$0xff]
    %v1358 = vld [vmem:[#allocation8 + $0x520] sm:$0xff]
    %v1359 = vld [vmem:[#allocation8 + $0x528] sm:$0xff]
    %v1360 = vld [vmem:[#allocation8 + $0x530] sm:$0xff]
    %v1361 = vld [vmem:[#allocation8 + $0x538] sm:$0xff]
    %v1362 = vld [vmem:[#allocation8 + $0x540] sm:$0xff]
    %v1363 = vld [vmem:[#allocation8 + $0x548] sm:$0xff]
    %v1364 = vld [vmem:[#allocation8 + $0x550] sm:$0xff]
    %v1365 = vld [vmem:[#allocation8 + $0x558] sm:$0xff]
    %v1366 = vld [vmem:[#allocation8 + $0x560] sm:$0xff]
    %v1367 = vld [vmem:[#allocation8 + $0x568] sm:$0xff]
    %v1368 = vld [vmem:[#allocation8 + $0x570] sm:$0xff]
    %v1369 = vld [vmem:[#allocation8 + $0x578] sm:$0xff]
    %v1370 = vld [vmem:[#allocation8 + $0x580] sm:$0xff]
    %v1371 = vld [vmem:[#allocation8 + $0x588] sm:$0xff]
    %v1372 = vld [vmem:[#allocation8 + $0x590] sm:$0xff]
    %v1373 = vld [vmem:[#allocation8 + $0x598] sm:$0xff]
    %v1374 = vld [vmem:[#allocation8 + $0x5a0] sm:$0xff]
    %v1375 = vld [vmem:[#allocation8 + $0x5a8] sm:$0xff]
    %v1376 = vld [vmem:[#allocation8 + $0x5b0] sm:$0xff]
    %v1377 = vld [vmem:[#allocation8 + $0x5b8] sm:$0xff]
    %v1378 = vld [vmem:[#allocation8 + $0x5c0] sm:$0xff]
    %v1379 = vld [vmem:[#allocation8 + $0x5c8] sm:$0xff]
    %v1380 = vld [vmem:[#allocation8 + $0x5d0] sm:$0xff]
    %v1381 = vld [vmem:[#allocation8 + $0x5d8] sm:$0xff]
    %v1382 = vld [vmem:[#allocation8 + $0x5e0] sm:$0xff]
    %v1383 = vld [vmem:[#allocation8 + $0x5e8] sm:$0xff]
    %v1384 = vld [vmem:[#allocation8 + $0x5f0] sm:$0xff]
    %v1385 = vld [vmem:[#allocation8 + $0x5f8] sm:$0xff]
    %v1386 = vld [vmem:[#allocation8 + $0x600] sm:$0xff]
    %v1387 = vld [vmem:[#allocation8 + $0x608] sm:$0xff]
    %v1388 = vld [vmem:[#allocation8 + $0x610] sm:$0xff]
    %v1389 = vld [vmem:[#allocation8 + $0x618] sm:$0xff]
    %v1390 = vld [vmem:[#allocation8 + $0x620] sm:$0xff]
    %v1391 = vld [vmem:[#allocation8 + $0x628] sm:$0xff]
    %v1392 = vld [vmem:[#allocation8 + $0x630] sm:$0xff]
    %v1393 = vld [vmem:[#allocation8 + $0x638] sm:$0xff]
    %v1394 = vld [vmem:[#allocation8 + $0x640] sm:$0xff]
    %v1395 = vld [vmem:[#allocation8 + $0x648] sm:$0xff]
    %v1396 = vld [vmem:[#allocation8 + $0x650] sm:$0xff]
    %v1397 = vld [vmem:[#allocation8 + $0x658] sm:$0xff]
    %v1398 = vld [vmem:[#allocation8 + $0x660] sm:$0xff]
    %v1399 = vld [vmem:[#allocation8 + $0x668] sm:$0xff]
    %v1400 = vld [vmem:[#allocation8 + $0x670] sm:$0xff]
    %v1401 = vld [vmem:[#allocation8 + $0x678] sm:$0xff]
    %v1402 = vld [vmem:[#allocation8 + $0x680] sm:$0xff]
    %v1403 = vld [vmem:[#allocation8 + $0x688] sm:$0xff]
    %v1404 = vld [vmem:[#allocation8 + $0x690] sm:$0xff]
    %v1405 = vld [vmem:[#allocation8 + $0x698] sm:$0xff]
    %v1406 = vld [vmem:[#allocation8 + $0x6a0] sm:$0xff]
    %v1407 = vld [vmem:[#allocation8 + $0x6a8] sm:$0xff]
    %v1408 = vld [vmem:[#allocation8 + $0x6b0] sm:$0xff]
    %v1409 = vld [vmem:[#allocation8 + $0x6b8] sm:$0xff]
    %v1410 = vld [vmem:[#allocation8 + $0x6c0] sm:$0xff]
    %v1411 = vld [vmem:[#allocation8 + $0x6c8] sm:$0xff]
    %v1412 = vld [vmem:[#allocation8 + $0x6d0] sm:$0xff]
    %v1413 = vld [vmem:[#allocation8 + $0x6d8] sm:$0xff]
    %v1414 = vld [vmem:[#allocation8 + $0x6e0] sm:$0xff]
    %v1415 = vld [vmem:[#allocation8 + $0x6e8] sm:$0xff]
    %v1416 = vld [vmem:[#allocation8 + $0x6f0] sm:$0xff]
    %v1417 = vld [vmem:[#allocation8 + $0x6f8] sm:$0xff]
    %v1418 = vld [vmem:[#allocation8 + $0x700] sm:$0xff]
    %v1419 = vld [vmem:[#allocation8 + $0x708] sm:$0xff]
    %v1420 = vld [vmem:[#allocation8 + $0x710] sm:$0xff]
    %v1421 = vld [vmem:[#allocation8 + $0x718] sm:$0xff]
    %v1422 = vld [vmem:[#allocation8 + $0x720] sm:$0xff]
    %v1423 = vld [vmem:[#allocation8 + $0x728] sm:$0xff]
    %v1424 = vld [vmem:[#allocation8 + $0x730] sm:$0xff]
    %v1425 = vld [vmem:[#allocation8 + $0x738] sm:$0xff]
    %v1426 = vld [vmem:[#allocation8 + $0x740] sm:$0xff]
    %v1427 = vld [vmem:[#allocation8 + $0x748] sm:$0xff]
    %v1428 = vld [vmem:[#allocation8 + $0x750] sm:$0xff]
    %v1429 = vld [vmem:[#allocation8 + $0x758] sm:$0xff]
    %v1430 = vld [vmem:[#allocation8 + $0x760] sm:$0xff]
    %v1431 = vld [vmem:[#allocation8 + $0x768] sm:$0xff]
    %v1432 = vld [vmem:[#allocation8 + $0x770] sm:$0xff]
    %v1433 = vld [vmem:[#allocation8 + $0x778] sm:$0xff]
    %v1434 = vld [vmem:[#allocation8 + $0x780] sm:$0xff]
    %v1435 = vld [vmem:[#allocation8 + $0x788] sm:$0xff]
    %v1436 = vld [vmem:[#allocation8 + $0x790] sm:$0xff]
    %v1437 = vld [vmem:[#allocation8 + $0x798] sm:$0xff]
    %v1438 = vld [vmem:[#allocation8 + $0x7a0] sm:$0xff]
    %v1439 = vld [vmem:[#allocation8 + $0x7a8] sm:$0xff]
    %v1440 = vld [vmem:[#allocation8 + $0x7b0] sm:$0xff]
    %v1441 = vld [vmem:[#allocation8 + $0x7b8] sm:$0xff]
    %v1442 = vld [vmem:[#allocation8 + $0x7c0] sm:$0xff]
    %v1443 = vld [vmem:[#allocation8 + $0x7c8] sm:$0xff]
    %v1444 = vld [vmem:[#allocation8 + $0x7d0] sm:$0xff]
    %v1445 = vld [vmem:[#allocation8 + $0x7d8] sm:$0xff]
    %v1446 = vld [vmem:[#allocation8 + $0x7e0] sm:$0xff]
    %v1447 = vld [vmem:[#allocation8 + $0x7e8] sm:$0xff]
    %v1448 = vld [vmem:[#allocation8 + $0x7f0] sm:$0xff]
    %v1449 = vld [vmem:[#allocation8 + $0x7f8] sm:$0xff]
    %v1450 = vld [vmem:[#allocation10] sm:$0xf]
    %v1452 = vlaneseq
    %v1453 = vshrl.u32 %v1452, 7
    %v1454 = vsub.s32 0, %v1453
    %v1455 = vrot.slane %v1450, %v1454
    %v1456 = vlaneseq
    %v1457 = vshrl.u32 %v1456, 7
    %v1458 = vsub.s32 1, %v1457
    %v1459 = vrot.slane %v1450, %v1458
    %v1460 = vlaneseq
    %v1461 = vshrl.u32 %v1460, 7
    %v1462 = vsub.s32 2, %v1461
    %v1463 = vrot.slane %v1450, %v1462
    %v1464 = vlaneseq
    %v1465 = vshrl.u32 %v1464, 7
    %v1466 = vsub.s32 3, %v1465
    %v1467 = vrot.slane %v1450, %v1466
    %1472 = vmatprep.subr.mxu0 %v1195
    %1473 = vmatpush1.msra.mxu0 %v1194
    %1474 = vmatprep.subr.mxu0 %v1199
    %1475 = vmatpush1.msra.mxu0 %v1198
    %1476 = vmatprep.subr.mxu0 %v1203
    %1477 = vmatpush1.msra.mxu0 %v1202
    %1478 = vmatprep.subr.mxu0 %v1207
    %1479 = vmatpush1.msra.mxu0 %v1206
    %1480 = vmatprep.subr.mxu0 %v1211
    %1481 = vmatpush1.msra.mxu0 %v1210
    %1482 = vmatprep.subr.mxu0 %v1215
    %1483 = vmatpush1.msra.mxu0 %v1214
    %1484 = vmatprep.subr.mxu0 %v1219
    %1485 = vmatpush1.msra.mxu0 %v1218
    %1486 = vmatprep.subr.mxu0 %v1223
    %1487 = vmatpush1.msra.mxu0 %v1222
    %1488 = vmatprep.subr.mxu0 %v1227
    %1489 = vmatpush1.msra.mxu0 %v1226
    %1490 = vmatprep.subr.mxu0 %v1231
    %1491 = vmatpush1.msra.mxu0 %v1230
    %1492 = vmatprep.subr.mxu0 %v1235
    %1493 = vmatpush1.msra.mxu0 %v1234
    %1494 = vmatprep.subr.mxu0 %v1239
    %1495 = vmatpush1.msra.mxu0 %v1238
    %1496 = vmatprep.subr.mxu0 %v1243
    %1497 = vmatpush1.msra.mxu0 %v1242
    %1498 = vmatprep.subr.mxu0 %v1247
    %1499 = vmatpush1.msra.mxu0 %v1246
    %1500 = vmatprep.subr.mxu0 %v1251
    %1501 = vmatpush1.msra.mxu0 %v1250
    %1502 = vmatprep.subr.mxu0 %v1255
    %1503 = vmatpush1.msra.mxu0 %v1254
    %1504 = vmatprep.subr.mxu0 %v1259
    %1505 = vmatpush1.msra.mxu0 %v1258
    %1506 = vmatprep.subr.mxu0 %v1263
    %1507 = vmatpush1.msra.mxu0 %v1262
    %1508 = vmatprep.subr.mxu0 %v1267
    %1509 = vmatpush1.msra.mxu0 %v1266
    %1510 = vmatprep.subr.mxu0 %v1271
    %1511 = vmatpush1.msra.mxu0 %v1270
    %1512 = vmatprep.subr.mxu0 %v1275
    %1513 = vmatpush1.msra.mxu0 %v1274
    %1514 = vmatprep.subr.mxu0 %v1279
    %1515 = vmatpush1.msra.mxu0 %v1278
    %1516 = vmatprep.subr.mxu0 %v1283
    %1517 = vmatpush1.msra.mxu0 %v1282
    %1518 = vmatprep.subr.mxu0 %v1287
    %1519 = vmatpush1.msra.mxu0 %v1286
    %1520 = vmatprep.subr.mxu0 %v1291
    %1521 = vmatpush1.msra.mxu0 %v1290
    %1522 = vmatprep.subr.mxu0 %v1295
    %1523 = vmatpush1.msra.mxu0 %v1294
    %1524 = vmatprep.subr.mxu0 %v1299
    %1525 = vmatpush1.msra.mxu0 %v1298
    %1526 = vmatprep.subr.mxu0 %v1303
    %1527 = vmatpush1.msra.mxu0 %v1302
    %1528 = vmatprep.subr.mxu0 %v1307
    %1529 = vmatpush1.msra.mxu0 %v1306
    %1530 = vmatprep.subr.mxu0 %v1311
    %1531 = vmatpush1.msra.mxu0 %v1310
    %1532 = vmatprep.subr.mxu0 %v1315
    %1533 = vmatpush1.msra.mxu0 %v1314
    %1534 = vmatprep.subr.mxu0 %v1319
    %1535 = vmatpush1.msra.mxu0 %v1318
    %1536 = vmatprep.mubr.f32.mxu0 %v1191
    %1537 = vmatmul.mubr.f32.gmra.mrb[0].mxu0 %v1190
    %v1538 = vpop.f32.mrb[0].mxu0
    %v1539 = vadd.f32 %v1455, %v1538
    %v1540 = vpop.f32.mrb[0].mxu0
    %v1541 = vadd.f32 %v1459, %v1540
    %1542 = vdwg.mxu0
    %1543 = vmatprep.subr.mxu0 %v1323
    %1544 = vmatpush1.msra.mxu0 %v1322
    %1545 = vmatprep.subr.mxu0 %v1327
    %1546 = vmatpush1.msra.mxu0 %v1326
    %1547 = vmatprep.subr.mxu0 %v1331
    %1548 = vmatpush1.msra.mxu0 %v1330
    %1549 = vmatprep.subr.mxu0 %v1335
    %1550 = vmatpush1.msra.mxu0 %v1334
    %1551 = vmatprep.subr.mxu0 %v1339
    %1552 = vmatpush1.msra.mxu0 %v1338
    %1553 = vmatprep.subr.mxu0 %v1343
    %1554 = vmatpush1.msra.mxu0 %v1342
    %1555 = vmatprep.subr.mxu0 %v1347
    %1556 = vmatpush1.msra.mxu0 %v1346
    %1557 = vmatprep.subr.mxu0 %v1351
    %1558 = vmatpush1.msra.mxu0 %v1350
    %1559 = vmatprep.subr.mxu0 %v1355
    %1560 = vmatpush1.msra.mxu0 %v1354
    %1561 = vmatprep.subr.mxu0 %v1359
    %1562 = vmatpush1.msra.mxu0 %v1358
    %1563 = vmatprep.subr.mxu0 %v1363
    %1564 = vmatpush1.msra.mxu0 %v1362
    %1565 = vmatprep.subr.mxu0 %v1367
    %1566 = vmatpush1.msra.mxu0 %v1366
    %1567 = vmatprep.subr.mxu0 %v1371
    %1568 = vmatpush1.msra.mxu0 %v1370
    %1569 = vmatprep.subr.mxu0 %v1375
    %1570 = vmatpush1.msra.mxu0 %v1374
    %1571 = vmatprep.subr.mxu0 %v1379
    %1572 = vmatpush1.msra.mxu0 %v1378
    %1573 = vmatprep.subr.mxu0 %v1383
    %1574 = vmatpush1.msra.mxu0 %v1382
    %1575 = vmatprep.subr.mxu0 %v1387
    %1576 = vmatpush1.msra.mxu0 %v1386
    %1577 = vmatprep.subr.mxu0 %v1391
    %1578 = vmatpush1.msra.mxu0 %v1390
    %1579 = vmatprep.subr.mxu0 %v1395
    %1580 = vmatpush1.msra.mxu0 %v1394
    %1581 = vmatprep.subr.mxu0 %v1399
    %1582 = vmatpush1.msra.mxu0 %v1398
    %1583 = vmatprep.subr.mxu0 %v1403
    %1584 = vmatpush1.msra.mxu0 %v1402
    %1585 = vmatprep.subr.mxu0 %v1407
    %1586 = vmatpush1.msra.mxu0 %v1406
    %1587 = vmatprep.subr.mxu0 %v1411
    %1588 = vmatpush1.msra.mxu0 %v1410
    %1589 = vmatprep.subr.mxu0 %v1415
    %1590 = vmatpush1.msra.mxu0 %v1414
    %1591 = vmatprep.subr.mxu0 %v1419
    %1592 = vmatpush1.msra.mxu0 %v1418
    %1593 = vmatprep.subr.mxu0 %v1423
    %1594 = vmatpush1.msra.mxu0 %v1422
    %1595 = vmatprep.subr.mxu0 %v1427
    %1596 = vmatpush1.msra.mxu0 %v1426
    %1597 = vmatprep.subr.mxu0 %v1431
    %1598 = vmatpush1.msra.mxu0 %v1430
    %1599 = vmatprep.subr.mxu0 %v1435
    %1600 = vmatpush1.msra.mxu0 %v1434
    %1601 = vmatprep.subr.mxu0 %v1439
    %1602 = vmatpush1.msra.mxu0 %v1438
    %1603 = vmatprep.subr.mxu0 %v1443
    %1604 = vmatpush1.msra.mxu0 %v1442
    %1605 = vmatprep.subr.mxu0 %v1447
    %1606 = vmatpush1.msra.mxu0 %v1446
    %1607 = vmatprep.mubr.f32.mxu0 %v1193
    %1608 = vmatmul.mubr.f32.gmra.mrb[0].mxu0 %v1192
    %v1609 = vpop.f32.mrb[0].mxu0
    %v1610 = vadd.f32 %v1539, %v1609
    %v1611 = vpop.f32.mrb[0].mxu0
    %v1612 = vadd.f32 %v1541, %v1611
    %1613 = vdwg.mxu0
    %1614 = vmatprep.subr.mxu0 %v1197
    %1615 = vmatpush1.msra.mxu0 %v1196
    %1616 = vmatprep.subr.mxu0 %v1201
    %1617 = vmatpush1.msra.mxu0 %v1200
    %1618 = vmatprep.subr.mxu0 %v1205
    %1619 = vmatpush1.msra.mxu0 %v1204
    %1620 = vmatprep.subr.mxu0 %v1209
    %1621 = vmatpush1.msra.mxu0 %v1208
    %1622 = vmatprep.subr.mxu0 %v1213
    %1623 = vmatpush1.msra.mxu0 %v1212
    %1624 = vmatprep.subr.mxu0 %v1217
    %1625 = vmatpush1.msra.mxu0 %v1216
    %1626 = vmatprep.subr.mxu0 %v1221
    %1627 = vmatpush1.msra.mxu0 %v1220
    %1628 = vmatprep.subr.mxu0 %v1225
    %1629 = vmatpush1.msra.mxu0 %v1224
    %1630 = vmatprep.subr.mxu0 %v1229
    %1631 = vmatpush1.msra.mxu0 %v1228
    %1632 = vmatprep.subr.mxu0 %v1233
    %1633 = vmatpush1.msra.mxu0 %v1232
    %1634 = vmatprep.subr.mxu0 %v1237
    %1635 = vmatpush1.msra.mxu0 %v1236
    %1636 = vmatprep.subr.mxu0 %v1241
    %1637 = vmatpush1.msra.mxu0 %v1240
    %1638 = vmatprep.subr.mxu0 %v1245
    %1639 = vmatpush1.msra.mxu0 %v1244
    %1640 = vmatprep.subr.mxu0 %v1249
    %1641 = vmatpush1.msra.mxu0 %v1248
    %1642 = vmatprep.subr.mxu0 %v1253
    %1643 = vmatpush1.msra.mxu0 %v1252
    %1644 = vmatprep.subr.mxu0 %v1257
    %1645 = vmatpush1.msra.mxu0 %v1256
    %1646 = vmatprep.subr.mxu0 %v1261
    %1647 = vmatpush1.msra.mxu0 %v1260
    %1648 = vmatprep.subr.mxu0 %v1265
    %1649 = vmatpush1.msra.mxu0 %v1264
    %1650 = vmatprep.subr.mxu0 %v1269
    %1651 = vmatpush1.msra.mxu0 %v1268
    %1652 = vmatprep.subr.mxu0 %v1273
    %1653 = vmatpush1.msra.mxu0 %v1272
    %1654 = vmatprep.subr.mxu0 %v1277
    %1655 = vmatpush1.msra.mxu0 %v1276
    %1656 = vmatprep.subr.mxu0 %v1281
    %1657 = vmatpush1.msra.mxu0 %v1280
    %1658 = vmatprep.subr.mxu0 %v1285
    %1659 = vmatpush1.msra.mxu0 %v1284
    %1660 = vmatprep.subr.mxu0 %v1289
    %1661 = vmatpush1.msra.mxu0 %v1288
    %1662 = vmatprep.subr.mxu0 %v1293
    %1663 = vmatpush1.msra.mxu0 %v1292
    %1664 = vmatprep.subr.mxu0 %v1297
    %1665 = vmatpush1.msra.mxu0 %v1296
    %1666 = vmatprep.subr.mxu0 %v1301
    %1667 = vmatpush1.msra.mxu0 %v1300
    %1668 = vmatprep.subr.mxu0 %v1305
    %1669 = vmatpush1.msra.mxu0 %v1304
    %1670 = vmatprep.subr.mxu0 %v1309
    %1671 = vmatpush1.msra.mxu0 %v1308
    %1672 = vmatprep.subr.mxu0 %v1313
    %1673 = vmatpush1.msra.mxu0 %v1312
    %1674 = vmatprep.subr.mxu0 %v1317
    %1675 = vmatpush1.msra.mxu0 %v1316
    %1676 = vmatprep.subr.mxu0 %v1321
    %1677 = vmatpush1.msra.mxu0 %v1320
    %1678 = vmatprep.mubr.f32.mxu0 %v1191
    %1679 = vmatmul.mubr.f32.gmra.mrb[0].mxu0 %v1190
    %v1680 = vpop.f32.mrb[0].mxu0
    %v1681 = vadd.f32 %v1463, %v1680
    %v1682 = vpop.f32.mrb[0].mxu0
    %v1683 = vadd.f32 %v1467, %v1682
    %1684 = vdwg.mxu0
    %1685 = vmatprep.subr.mxu0 %v1325
    %1686 = vmatpush1.msra.mxu0 %v1324
    %1687 = vmatprep.subr.mxu0 %v1329
    %1688 = vmatpush1.msra.mxu0 %v1328
    %1689 = vmatprep.subr.mxu0 %v1333
    %1690 = vmatpush1.msra.mxu0 %v1332
    %1691 = vmatprep.subr.mxu0 %v1337
    %1692 = vmatpush1.msra.mxu0 %v1336
    %1693 = vmatprep.subr.mxu0 %v1341
    %1694 = vmatpush1.msra.mxu0 %v1340
    %1695 = vmatprep.subr.mxu0 %v1345
    %1696 = vmatpush1.msra.mxu0 %v1344
    %1697 = vmatprep.subr.mxu0 %v1349
    %1698 = vmatpush1.msra.mxu0 %v1348
    %1699 = vmatprep.subr.mxu0 %v1353
    %1700 = vmatpush1.msra.mxu0 %v1352
    %1701 = vmatprep.subr.mxu0 %v1357
    %1702 = vmatpush1.msra.mxu0 %v1356
    %1703 = vmatprep.subr.mxu0 %v1361
    %1704 = vmatpush1.msra.mxu0 %v1360
    %1705 = vmatprep.subr.mxu0 %v1365
    %1706 = vmatpush1.msra.mxu0 %v1364
    %1707 = vmatprep.subr.mxu0 %v1369
    %1708 = vmatpush1.msra.mxu0 %v1368
    %1709 = vmatprep.subr.mxu0 %v1373
    %1710 = vmatpush1.msra.mxu0 %v1372
    %1711 = vmatprep.subr.mxu0 %v1377
    %1712 = vmatpush1.msra.mxu0 %v1376
    %1713 = vmatprep.subr.mxu0 %v1381
    %1714 = vmatpush1.msra.mxu0 %v1380
    %1715 = vmatprep.subr.mxu0 %v1385
    %1716 = vmatpush1.msra.mxu0 %v1384
    %1717 = vmatprep.subr.mxu0 %v1389
    %1718 = vmatpush1.msra.mxu0 %v1388
    %1719 = vmatprep.subr.mxu0 %v1393
    %1720 = vmatpush1.msra.mxu0 %v1392
    %1721 = vmatprep.subr.mxu0 %v1397
    %1722 = vmatpush1.msra.mxu0 %v1396
    %1723 = vmatprep.subr.mxu0 %v1401
    %1724 = vmatpush1.msra.mxu0 %v1400
    %1725 = vmatprep.subr.mxu0 %v1405
    %1726 = vmatpush1.msra.mxu0 %v1404
    %1727 = vmatprep.subr.mxu0 %v1409
    %1728 = vmatpush1.msra.mxu0 %v1408
    %1729 = vmatprep.subr.mxu0 %v1413
    %1730 = vmatpush1.msra.mxu0 %v1412
    %1731 = vmatprep.subr.mxu0 %v1417
    %1732 = vmatpush1.msra.mxu0 %v1416
    %1733 = vmatprep.subr.mxu0 %v1421
    %1734 = vmatpush1.msra.mxu0 %v1420
    %1735 = vmatprep.subr.mxu0 %v1425
    %1736 = vmatpush1.msra.mxu0 %v1424
    %1737 = vmatprep.subr.mxu0 %v1429
    %1738 = vmatpush1.msra.mxu0 %v1428
    %1739 = vmatprep.subr.mxu0 %v1433
    %1740 = vmatpush1.msra.mxu0 %v1432
    %1741 = vmatprep.subr.mxu0 %v1437
    %1742 = vmatpush1.msra.mxu0 %v1436
    %1743 = vmatprep.subr.mxu0 %v1441
    %1744 = vmatpush1.msra.mxu0 %v1440
    %1745 = vmatprep.subr.mxu0 %v1445
    %1746 = vmatpush1.msra.mxu0 %v1444
    %1747 = vmatprep.subr.mxu0 %v1449
    %1748 = vmatpush1.msra.mxu0 %v1448
    %1749 = vmatprep.mubr.f32.mxu0 %v1193
    %1750 = vmatmul.mubr.f32.gmra.mrb[0].mxu0 %v1192
    %v1751 = vpop.f32.mrb[0].mxu0
    %v1752 = vadd.f32 %v1681, %v1751
    %v1753 = vpop.f32.mrb[0].mxu0
    %v1754 = vadd.f32 %v1683, %v1753
    %1755 = vdwg.mxu0
    %v1756 = vmax.f32 %v1610, 0.0
    %v1757 = vmax.f32 %v1612, 0.0
    %v1758 = vmax.f32 %v1752, 0.0
    %v1759 = vmax.f32 %v1754, 0.0
    %v1760 = vld [vmem:[#allocation11] sm:$0xff]
    %v1761 = vld [vmem:[#allocation11 + $0x8] sm:$0xff]
    %v1762 = vld [vmem:[#allocation11 + $0x10] sm:$0xff]
    %v1763 = vld [vmem:[#allocation11 + $0x18] sm:$0xff]
    %v1764 = vld [vmem:[#allocation11 + $0x20] sm:$0xff]
    %v1765 = vld [vmem:[#allocation11 + $0x28] sm:$0xff]
    %v1766 = vld [vmem:[#allocation11 + $0x30] sm:$0xff]
    %v1767 = vld [vmem:[#allocation11 + $0x38] sm:$0xff]
    %v1768 = vld [vmem:[#allocation11 + $0x40] sm:$0xff]
    %v1769 = vld [vmem:[#allocation11 + $0x48] sm:$0xff]
    %v1770 = vld [vmem:[#allocation11 + $0x50] sm:$0xff]
    %v1771 = vld [vmem:[#allocation11 + $0x58] sm:$0xff]
    %v1772 = vld [vmem:[#allocation11 + $0x60] sm:$0xff]
    %v1773 = vld [vmem:[#allocation11 + $0x68] sm:$0xff]
    %v1774 = vld [vmem:[#allocation11 + $0x70] sm:$0xff]
    %v1775 = vld [vmem:[#allocation11 + $0x78] sm:$0xff]
    %v1776 = vld [vmem:[#allocation11 + $0x80] sm:$0xff]
    %v1777 = vld [vmem:[#allocation11 + $0x88] sm:$0xff]
    %v1778 = vld [vmem:[#allocation11 + $0x90] sm:$0xff]
    %v1779 = vld [vmem:[#allocation11 + $0x98] sm:$0xff]
    %v1780 = vld [vmem:[#allocation11 + $0xa0] sm:$0xff]
    %v1781 = vld [vmem:[#allocation11 + $0xa8] sm:$0xff]
    %v1782 = vld [vmem:[#allocation11 + $0xb0] sm:$0xff]
    %v1783 = vld [vmem:[#allocation11 + $0xb8] sm:$0xff]
    %v1784 = vld [vmem:[#allocation11 + $0xc0] sm:$0xff]
    %v1785 = vld [vmem:[#allocation11 + $0xc8] sm:$0xff]
    %v1786 = vld [vmem:[#allocation11 + $0xd0] sm:$0xff]
    %v1787 = vld [vmem:[#allocation11 + $0xd8] sm:$0xff]
    %v1788 = vld [vmem:[#allocation11 + $0xe0] sm:$0xff]
    %v1789 = vld [vmem:[#allocation11 + $0xe8] sm:$0xff]
    %v1790 = vld [vmem:[#allocation11 + $0xf0] sm:$0xff]
    %v1791 = vld [vmem:[#allocation11 + $0xf8] sm:$0xff]
    %v1792 = vld [vmem:[#allocation11 + $0x100] sm:$0xff]
    %v1793 = vld [vmem:[#allocation11 + $0x108] sm:$0xff]
    %v1794 = vld [vmem:[#allocation11 + $0x110] sm:$0xff]
    %v1795 = vld [vmem:[#allocation11 + $0x118] sm:$0xff]
    %v1796 = vld [vmem:[#allocation11 + $0x120] sm:$0xff]
    %v1797 = vld [vmem:[#allocation11 + $0x128] sm:$0xff]
    %v1798 = vld [vmem:[#allocation11 + $0x130] sm:$0xff]
    %v1799 = vld [vmem:[#allocation11 + $0x138] sm:$0xff]
    %v1800 = vld [vmem:[#allocation11 + $0x140] sm:$0xff]
    %v1801 = vld [vmem:[#allocation11 + $0x148] sm:$0xff]
    %v1802 = vld [vmem:[#allocation11 + $0x150] sm:$0xff]
    %v1803 = vld [vmem:[#allocation11 + $0x158] sm:$0xff]
    %v1804 = vld [vmem:[#allocation11 + $0x160] sm:$0xff]
    %v1805 = vld [vmem:[#allocation11 + $0x168] sm:$0xff]
    %v1806 = vld [vmem:[#allocation11 + $0x170] sm:$0xff]
    %v1807 = vld [vmem:[#allocation11 + $0x178] sm:$0xff]
    %v1808 = vld [vmem:[#allocation11 + $0x180] sm:$0xff]
    %v1809 = vld [vmem:[#allocation11 + $0x188] sm:$0xff]
    %v1810 = vld [vmem:[#allocation11 + $0x190] sm:$0xff]
    %v1811 = vld [vmem:[#allocation11 + $0x198] sm:$0xff]
    %v1812 = vld [vmem:[#allocation11 + $0x1a0] sm:$0xff]
    %v1813 = vld [vmem:[#allocation11 + $0x1a8] sm:$0xff]
    %v1814 = vld [vmem:[#allocation11 + $0x1b0] sm:$0xff]
    %v1815 = vld [vmem:[#allocation11 + $0x1b8] sm:$0xff]
    %v1816 = vld [vmem:[#allocation11 + $0x1c0] sm:$0xff]
    %v1817 = vld [vmem:[#allocation11 + $0x1c8] sm:$0xff]
    %v1818 = vld [vmem:[#allocation11 + $0x1d0] sm:$0xff]
    %v1819 = vld [vmem:[#allocation11 + $0x1d8] sm:$0xff]
    %v1820 = vld [vmem:[#allocation11 + $0x1e0] sm:$0xff]
    %v1821 = vld [vmem:[#allocation11 + $0x1e8] sm:$0xff]
    %v1822 = vld [vmem:[#allocation11 + $0x1f0] sm:$0xff]
    %v1823 = vld [vmem:[#allocation11 + $0x1f8] sm:$0xff]
    %v1824 = vld [vmem:[#allocation11 + $0x200] sm:$0xff]
    %v1825 = vld [vmem:[#allocation11 + $0x208] sm:$0xff]
    %v1826 = vld [vmem:[#allocation11 + $0x210] sm:$0xff]
    %v1827 = vld [vmem:[#allocation11 + $0x218] sm:$0xff]
    %v1828 = vld [vmem:[#allocation11 + $0x220] sm:$0xff]
    %v1829 = vld [vmem:[#allocation11 + $0x228] sm:$0xff]
    %v1830 = vld [vmem:[#allocation11 + $0x230] sm:$0xff]
    %v1831 = vld [vmem:[#allocation11 + $0x238] sm:$0xff]
    %v1832 = vld [vmem:[#allocation11 + $0x240] sm:$0xff]
    %v1833 = vld [vmem:[#allocation11 + $0x248] sm:$0xff]
    %v1834 = vld [vmem:[#allocation11 + $0x250] sm:$0xff]
    %v1835 = vld [vmem:[#allocation11 + $0x258] sm:$0xff]
    %v1836 = vld [vmem:[#allocation11 + $0x260] sm:$0xff]
    %v1837 = vld [vmem:[#allocation11 + $0x268] sm:$0xff]
    %v1838 = vld [vmem:[#allocation11 + $0x270] sm:$0xff]
    %v1839 = vld [vmem:[#allocation11 + $0x278] sm:$0xff]
    %v1840 = vld [vmem:[#allocation11 + $0x280] sm:$0xff]
    %v1841 = vld [vmem:[#allocation11 + $0x288] sm:$0xff]
    %v1842 = vld [vmem:[#allocation11 + $0x290] sm:$0xff]
    %v1843 = vld [vmem:[#allocation11 + $0x298] sm:$0xff]
    %v1844 = vld [vmem:[#allocation11 + $0x2a0] sm:$0xff]
    %v1845 = vld [vmem:[#allocation11 + $0x2a8] sm:$0xff]
    %v1846 = vld [vmem:[#allocation11 + $0x2b0] sm:$0xff]
    %v1847 = vld [vmem:[#allocation11 + $0x2b8] sm:$0xff]
    %v1848 = vld [vmem:[#allocation11 + $0x2c0] sm:$0xff]
    %v1849 = vld [vmem:[#allocation11 + $0x2c8] sm:$0xff]
    %v1850 = vld [vmem:[#allocation11 + $0x2d0] sm:$0xff]
    %v1851 = vld [vmem:[#allocation11 + $0x2d8] sm:$0xff]
    %v1852 = vld [vmem:[#allocation11 + $0x2e0] sm:$0xff]
    %v1853 = vld [vmem:[#allocation11 + $0x2e8] sm:$0xff]
    %v1854 = vld [vmem:[#allocation11 + $0x2f0] sm:$0xff]
    %v1855 = vld [vmem:[#allocation11 + $0x2f8] sm:$0xff]
    %v1856 = vld [vmem:[#allocation11 + $0x300] sm:$0xff]
    %v1857 = vld [vmem:[#allocation11 + $0x308] sm:$0xff]
    %v1858 = vld [vmem:[#allocation11 + $0x310] sm:$0xff]
    %v1859 = vld [vmem:[#allocation11 + $0x318] sm:$0xff]
    %v1860 = vld [vmem:[#allocation11 + $0x320] sm:$0xff]
    %v1861 = vld [vmem:[#allocation11 + $0x328] sm:$0xff]
    %v1862 = vld [vmem:[#allocation11 + $0x330] sm:$0xff]
    %v1863 = vld [vmem:[#allocation11 + $0x338] sm:$0xff]
    %v1864 = vld [vmem:[#allocation11 + $0x340] sm:$0xff]
    %v1865 = vld [vmem:[#allocation11 + $0x348] sm:$0xff]
    %v1866 = vld [vmem:[#allocation11 + $0x350] sm:$0xff]
    %v1867 = vld [vmem:[#allocation11 + $0x358] sm:$0xff]
    %v1868 = vld [vmem:[#allocation11 + $0x360] sm:$0xff]
    %v1869 = vld [vmem:[#allocation11 + $0x368] sm:$0xff]
    %v1870 = vld [vmem:[#allocation11 + $0x370] sm:$0xff]
    %v1871 = vld [vmem:[#allocation11 + $0x378] sm:$0xff]
    %v1872 = vld [vmem:[#allocation11 + $0x380] sm:$0xff]
    %v1873 = vld [vmem:[#allocation11 + $0x388] sm:$0xff]
    %v1874 = vld [vmem:[#allocation11 + $0x390] sm:$0xff]
    %v1875 = vld [vmem:[#allocation11 + $0x398] sm:$0xff]
    %v1876 = vld [vmem:[#allocation11 + $0x3a0] sm:$0xff]
    %v1877 = vld [vmem:[#allocation11 + $0x3a8] sm:$0xff]
    %v1878 = vld [vmem:[#allocation11 + $0x3b0] sm:$0xff]
    %v1879 = vld [vmem:[#allocation11 + $0x3b8] sm:$0xff]
    %v1880 = vld [vmem:[#allocation11 + $0x3c0] sm:$0xff]
    %v1881 = vld [vmem:[#allocation11 + $0x3c8] sm:$0xff]
    %v1882 = vld [vmem:[#allocation11 + $0x3d0] sm:$0xff]
    %v1883 = vld [vmem:[#allocation11 + $0x3d8] sm:$0xff]
    %v1884 = vld [vmem:[#allocation11 + $0x3e0] sm:$0xff]
    %v1885 = vld [vmem:[#allocation11 + $0x3e8] sm:$0xff]
    %v1886 = vld [vmem:[#allocation11 + $0x3f0] sm:$0xff]
    %v1887 = vld [vmem:[#allocation11 + $0x3f8] sm:$0xff]
    %v1888 = vld [vmem:[#allocation11 + $0x400] sm:$0xff]
    %v1889 = vld [vmem:[#allocation11 + $0x408] sm:$0xff]
    %v1890 = vld [vmem:[#allocation11 + $0x410] sm:$0xff]
    %v1891 = vld [vmem:[#allocation11 + $0x418] sm:$0xff]
    %v1892 = vld [vmem:[#allocation11 + $0x420] sm:$0xff]
    %v1893 = vld [vmem:[#allocation11 + $0x428] sm:$0xff]
    %v1894 = vld [vmem:[#allocation11 + $0x430] sm:$0xff]
    %v1895 = vld [vmem:[#allocation11 + $0x438] sm:$0xff]
    %v1896 = vld [vmem:[#allocation11 + $0x440] sm:$0xff]
    %v1897 = vld [vmem:[#allocation11 + $0x448] sm:$0xff]
    %v1898 = vld [vmem:[#allocation11 + $0x450] sm:$0xff]
    %v1899 = vld [vmem:[#allocation11 + $0x458] sm:$0xff]
    %v1900 = vld [vmem:[#allocation11 + $0x460] sm:$0xff]
    %v1901 = vld [vmem:[#allocation11 + $0x468] sm:$0xff]
    %v1902 = vld [vmem:[#allocation11 + $0x470] sm:$0xff]
    %v1903 = vld [vmem:[#allocation11 + $0x478] sm:$0xff]
    %v1904 = vld [vmem:[#allocation11 + $0x480] sm:$0xff]
    %v1905 = vld [vmem:[#allocation11 + $0x488] sm:$0xff]
    %v1906 = vld [vmem:[#allocation11 + $0x490] sm:$0xff]
    %v1907 = vld [vmem:[#allocation11 + $0x498] sm:$0xff]
    %v1908 = vld [vmem:[#allocation11 + $0x4a0] sm:$0xff]
    %v1909 = vld [vmem:[#allocation11 + $0x4a8] sm:$0xff]
    %v1910 = vld [vmem:[#allocation11 + $0x4b0] sm:$0xff]
    %v1911 = vld [vmem:[#allocation11 + $0x4b8] sm:$0xff]
    %v1912 = vld [vmem:[#allocation11 + $0x4c0] sm:$0xff]
    %v1913 = vld [vmem:[#allocation11 + $0x4c8] sm:$0xff]
    %v1914 = vld [vmem:[#allocation11 + $0x4d0] sm:$0xff]
    %v1915 = vld [vmem:[#allocation11 + $0x4d8] sm:$0xff]
    %v1916 = vld [vmem:[#allocation11 + $0x4e0] sm:$0xff]
    %v1917 = vld [vmem:[#allocation11 + $0x4e8] sm:$0xff]
    %v1918 = vld [vmem:[#allocation11 + $0x4f0] sm:$0xff]
    %v1919 = vld [vmem:[#allocation11 + $0x4f8] sm:$0xff]
    %v1920 = vld [vmem:[#allocation11 + $0x500] sm:$0xff]
    %v1921 = vld [vmem:[#allocation11 + $0x508] sm:$0xff]
    %v1922 = vld [vmem:[#allocation11 + $0x510] sm:$0xff]
    %v1923 = vld [vmem:[#allocation11 + $0x518] sm:$0xff]
    %v1924 = vld [vmem:[#allocation11 + $0x520] sm:$0xff]
    %v1925 = vld [vmem:[#allocation11 + $0x528] sm:$0xff]
    %v1926 = vld [vmem:[#allocation11 + $0x530] sm:$0xff]
    %v1927 = vld [vmem:[#allocation11 + $0x538] sm:$0xff]
    %v1928 = vld [vmem:[#allocation11 + $0x540] sm:$0xff]
    %v1929 = vld [vmem:[#allocation11 + $0x548] sm:$0xff]
    %v1930 = vld [vmem:[#allocation11 + $0x550] sm:$0xff]
    %v1931 = vld [vmem:[#allocation11 + $0x558] sm:$0xff]
    %v1932 = vld [vmem:[#allocation11 + $0x560] sm:$0xff]
    %v1933 = vld [vmem:[#allocation11 + $0x568] sm:$0xff]
    %v1934 = vld [vmem:[#allocation11 + $0x570] sm:$0xff]
    %v1935 = vld [vmem:[#allocation11 + $0x578] sm:$0xff]
    %v1936 = vld [vmem:[#allocation11 + $0x580] sm:$0xff]
    %v1937 = vld [vmem:[#allocation11 + $0x588] sm:$0xff]
    %v1938 = vld [vmem:[#allocation11 + $0x590] sm:$0xff]
    %v1939 = vld [vmem:[#allocation11 + $0x598] sm:$0xff]
    %v1940 = vld [vmem:[#allocation11 + $0x5a0] sm:$0xff]
    %v1941 = vld [vmem:[#allocation11 + $0x5a8] sm:$0xff]
    %v1942 = vld [vmem:[#allocation11 + $0x5b0] sm:$0xff]
    %v1943 = vld [vmem:[#allocation11 + $0x5b8] sm:$0xff]
    %v1944 = vld [vmem:[#allocation11 + $0x5c0] sm:$0xff]
    %v1945 = vld [vmem:[#allocation11 + $0x5c8] sm:$0xff]
    %v1946 = vld [vmem:[#allocation11 + $0x5d0] sm:$0xff]
    %v1947 = vld [vmem:[#allocation11 + $0x5d8] sm:$0xff]
    %v1948 = vld [vmem:[#allocation11 + $0x5e0] sm:$0xff]
    %v1949 = vld [vmem:[#allocation11 + $0x5e8] sm:$0xff]
    %v1950 = vld [vmem:[#allocation11 + $0x5f0] sm:$0xff]
    %v1951 = vld [vmem:[#allocation11 + $0x5f8] sm:$0xff]
    %v1952 = vld [vmem:[#allocation11 + $0x600] sm:$0xff]
    %v1953 = vld [vmem:[#allocation11 + $0x608] sm:$0xff]
    %v1954 = vld [vmem:[#allocation11 + $0x610] sm:$0xff]
    %v1955 = vld [vmem:[#allocation11 + $0x618] sm:$0xff]
    %v1956 = vld [vmem:[#allocation11 + $0x620] sm:$0xff]
    %v1957 = vld [vmem:[#allocation11 + $0x628] sm:$0xff]
    %v1958 = vld [vmem:[#allocation11 + $0x630] sm:$0xff]
    %v1959 = vld [vmem:[#allocation11 + $0x638] sm:$0xff]
    %v1960 = vld [vmem:[#allocation11 + $0x640] sm:$0xff]
    %v1961 = vld [vmem:[#allocation11 + $0x648] sm:$0xff]
    %v1962 = vld [vmem:[#allocation11 + $0x650] sm:$0xff]
    %v1963 = vld [vmem:[#allocation11 + $0x658] sm:$0xff]
    %v1964 = vld [vmem:[#allocation11 + $0x660] sm:$0xff]
    %v1965 = vld [vmem:[#allocation11 + $0x668] sm:$0xff]
    %v1966 = vld [vmem:[#allocation11 + $0x670] sm:$0xff]
    %v1967 = vld [vmem:[#allocation11 + $0x678] sm:$0xff]
    %v1968 = vld [vmem:[#allocation11 + $0x680] sm:$0xff]
    %v1969 = vld [vmem:[#allocation11 + $0x688] sm:$0xff]
    %v1970 = vld [vmem:[#allocation11 + $0x690] sm:$0xff]
    %v1971 = vld [vmem:[#allocation11 + $0x698] sm:$0xff]
    %v1972 = vld [vmem:[#allocation11 + $0x6a0] sm:$0xff]
    %v1973 = vld [vmem:[#allocation11 + $0x6a8] sm:$0xff]
    %v1974 = vld [vmem:[#allocation11 + $0x6b0] sm:$0xff]
    %v1975 = vld [vmem:[#allocation11 + $0x6b8] sm:$0xff]
    %v1976 = vld [vmem:[#allocation11 + $0x6c0] sm:$0xff]
    %v1977 = vld [vmem:[#allocation11 + $0x6c8] sm:$0xff]
    %v1978 = vld [vmem:[#allocation11 + $0x6d0] sm:$0xff]
    %v1979 = vld [vmem:[#allocation11 + $0x6d8] sm:$0xff]
    %v1980 = vld [vmem:[#allocation11 + $0x6e0] sm:$0xff]
    %v1981 = vld [vmem:[#allocation11 + $0x6e8] sm:$0xff]
    %v1982 = vld [vmem:[#allocation11 + $0x6f0] sm:$0xff]
    %v1983 = vld [vmem:[#allocation11 + $0x6f8] sm:$0xff]
    %v1984 = vld [vmem:[#allocation11 + $0x700] sm:$0xff]
    %v1985 = vld [vmem:[#allocation11 + $0x708] sm:$0xff]
    %v1986 = vld [vmem:[#allocation11 + $0x710] sm:$0xff]
    %v1987 = vld [vmem:[#allocation11 + $0x718] sm:$0xff]
    %v1988 = vld [vmem:[#allocation11 + $0x720] sm:$0xff]
    %v1989 = vld [vmem:[#allocation11 + $0x728] sm:$0xff]
    %v1990 = vld [vmem:[#allocation11 + $0x730] sm:$0xff]
    %v1991 = vld [vmem:[#allocation11 + $0x738] sm:$0xff]
    %v1992 = vld [vmem:[#allocation11 + $0x740] sm:$0xff]
    %v1993 = vld [vmem:[#allocation11 + $0x748] sm:$0xff]
    %v1994 = vld [vmem:[#allocation11 + $0x750] sm:$0xff]
    %v1995 = vld [vmem:[#allocation11 + $0x758] sm:$0xff]
    %v1996 = vld [vmem:[#allocation11 + $0x760] sm:$0xff]
    %v1997 = vld [vmem:[#allocation11 + $0x768] sm:$0xff]
    %v1998 = vld [vmem:[#allocation11 + $0x770] sm:$0xff]
    %v1999 = vld [vmem:[#allocation11 + $0x778] sm:$0xff]
    %v2000 = vld [vmem:[#allocation11 + $0x780] sm:$0xff]
    %v2001 = vld [vmem:[#allocation11 + $0x788] sm:$0xff]
    %v2002 = vld [vmem:[#allocation11 + $0x790] sm:$0xff]
    %v2003 = vld [vmem:[#allocation11 + $0x798] sm:$0xff]
    %v2004 = vld [vmem:[#allocation11 + $0x7a0] sm:$0xff]
    %v2005 = vld [vmem:[#allocation11 + $0x7a8] sm:$0xff]
    %v2006 = vld [vmem:[#allocation11 + $0x7b0] sm:$0xff]
    %v2007 = vld [vmem:[#allocation11 + $0x7b8] sm:$0xff]
    %v2008 = vld [vmem:[#allocation11 + $0x7c0] sm:$0xff]
    %v2009 = vld [vmem:[#allocation11 + $0x7c8] sm:$0xff]
    %v2010 = vld [vmem:[#allocation11 + $0x7d0] sm:$0xff]
    %v2011 = vld [vmem:[#allocation11 + $0x7d8] sm:$0xff]
    %v2012 = vld [vmem:[#allocation11 + $0x7e0] sm:$0xff]
    %v2013 = vld [vmem:[#allocation11 + $0x7e8] sm:$0xff]
    %v2014 = vld [vmem:[#allocation11 + $0x7f0] sm:$0xff]
    %v2015 = vld [vmem:[#allocation11 + $0x7f8] sm:$0xff]
    %v2016 = vld [vmem:[#allocation13] sm:$0xf]
    %v2018 = vlaneseq
    %v2019 = vshrl.u32 %v2018, 7
    %v2020 = vsub.s32 0, %v2019
    %v2021 = vrot.slane %v2016, %v2020
    %v2022 = vlaneseq
    %v2023 = vshrl.u32 %v2022, 7
    %v2024 = vsub.s32 1, %v2023
    %v2025 = vrot.slane %v2016, %v2024
    %v2026 = vlaneseq
    %v2027 = vshrl.u32 %v2026, 7
    %v2028 = vsub.s32 2, %v2027
    %v2029 = vrot.slane %v2016, %v2028
    %v2030 = vlaneseq
    %v2031 = vshrl.u32 %v2030, 7
    %v2032 = vsub.s32 3, %v2031
    %v2033 = vrot.slane %v2016, %v2032
    %2038 = vmatprep.subr.mxu0 %v1761
    %2039 = vmatpush1.msra.mxu0 %v1760
    %2040 = vmatprep.subr.mxu0 %v1765
    %2041 = vmatpush1.msra.mxu0 %v1764
    %2042 = vmatprep.subr.mxu0 %v1769
    %2043 = vmatpush1.msra.mxu0 %v1768
    %2044 = vmatprep.subr.mxu0 %v1773
    %2045 = vmatpush1.msra.mxu0 %v1772
    %2046 = vmatprep.subr.mxu0 %v1777
    %2047 = vmatpush1.msra.mxu0 %v1776
    %2048 = vmatprep.subr.mxu0 %v1781
    %2049 = vmatpush1.msra.mxu0 %v1780
    %2050 = vmatprep.subr.mxu0 %v1785
    %2051 = vmatpush1.msra.mxu0 %v1784
    %2052 = vmatprep.subr.mxu0 %v1789
    %2053 = vmatpush1.msra.mxu0 %v1788
    %2054 = vmatprep.subr.mxu0 %v1793
    %2055 = vmatpush1.msra.mxu0 %v1792
    %2056 = vmatprep.subr.mxu0 %v1797
    %2057 = vmatpush1.msra.mxu0 %v1796
    %2058 = vmatprep.subr.mxu0 %v1801
    %2059 = vmatpush1.msra.mxu0 %v1800
    %2060 = vmatprep.subr.mxu0 %v1805
    %2061 = vmatpush1.msra.mxu0 %v1804
    %2062 = vmatprep.subr.mxu0 %v1809
    %2063 = vmatpush1.msra.mxu0 %v1808
    %2064 = vmatprep.subr.mxu0 %v1813
    %2065 = vmatpush1.msra.mxu0 %v1812
    %2066 = vmatprep.subr.mxu0 %v1817
    %2067 = vmatpush1.msra.mxu0 %v1816
    %2068 = vmatprep.subr.mxu0 %v1821
    %2069 = vmatpush1.msra.mxu0 %v1820
    %2070 = vmatprep.subr.mxu0 %v1825
    %2071 = vmatpush1.msra.mxu0 %v1824
    %2072 = vmatprep.subr.mxu0 %v1829
    %2073 = vmatpush1.msra.mxu0 %v1828
    %2074 = vmatprep.subr.mxu0 %v1833
    %2075 = vmatpush1.msra.mxu0 %v1832
    %2076 = vmatprep.subr.mxu0 %v1837
    %2077 = vmatpush1.msra.mxu0 %v1836
    %2078 = vmatprep.subr.mxu0 %v1841
    %2079 = vmatpush1.msra.mxu0 %v1840
    %2080 = vmatprep.subr.mxu0 %v1845
    %2081 = vmatpush1.msra.mxu0 %v1844
    %2082 = vmatprep.subr.mxu0 %v1849
    %2083 = vmatpush1.msra.mxu0 %v1848
    %2084 = vmatprep.subr.mxu0 %v1853
    %2085 = vmatpush1.msra.mxu0 %v1852
    %2086 = vmatprep.subr.mxu0 %v1857
    %2087 = vmatpush1.msra.mxu0 %v1856
    %2088 = vmatprep.subr.mxu0 %v1861
    %2089 = vmatpush1.msra.mxu0 %v1860
    %2090 = vmatprep.subr.mxu0 %v1865
    %2091 = vmatpush1.msra.mxu0 %v1864
    %2092 = vmatprep.subr.mxu0 %v1869
    %2093 = vmatpush1.msra.mxu0 %v1868
    %2094 = vmatprep.subr.mxu0 %v1873
    %2095 = vmatpush1.msra.mxu0 %v1872
    %2096 = vmatprep.subr.mxu0 %v1877
    %2097 = vmatpush1.msra.mxu0 %v1876
    %2098 = vmatprep.subr.mxu0 %v1881
    %2099 = vmatpush1.msra.mxu0 %v1880
    %2100 = vmatprep.subr.mxu0 %v1885
    %2101 = vmatpush1.msra.mxu0 %v1884
    %2102 = vmatprep.mubr.f32.mxu0 %v1757
    %2103 = vmatmul.mubr.f32.gmra.mrb[0].mxu0 %v1756
    %v2104 = vpop.f32.mrb[0].mxu0
    %v2105 = vadd.f32 %v2021, %v2104
    %v2106 = vpop.f32.mrb[0].mxu0
    %v2107 = vadd.f32 %v2025, %v2106
    %2108 = vdwg.mxu0
    %2109 = vmatprep.subr.mxu0 %v1889
    %2110 = vmatpush1.msra.mxu0 %v1888
    %2111 = vmatprep.subr.mxu0 %v1893
    %2112 = vmatpush1.msra.mxu0 %v1892
    %2113 = vmatprep.subr.mxu0 %v1897
    %2114 = vmatpush1.msra.mxu0 %v1896
    %2115 = vmatprep.subr.mxu0 %v1901
    %2116 = vmatpush1.msra.mxu0 %v1900
    %2117 = vmatprep.subr.mxu0 %v1905
    %2118 = vmatpush1.msra.mxu0 %v1904
    %2119 = vmatprep.subr.mxu0 %v1909
    %2120 = vmatpush1.msra.mxu0 %v1908
    %2121 = vmatprep.subr.mxu0 %v1913
    %2122 = vmatpush1.msra.mxu0 %v1912
    %2123 = vmatprep.subr.mxu0 %v1917
    %2124 = vmatpush1.msra.mxu0 %v1916
    %2125 = vmatprep.subr.mxu0 %v1921
    %2126 = vmatpush1.msra.mxu0 %v1920
    %2127 = vmatprep.subr.mxu0 %v1925
    %2128 = vmatpush1.msra.mxu0 %v1924
    %2129 = vmatprep.subr.mxu0 %v1929
    %2130 = vmatpush1.msra.mxu0 %v1928
    %2131 = vmatprep.subr.mxu0 %v1933
    %2132 = vmatpush1.msra.mxu0 %v1932
    %2133 = vmatprep.subr.mxu0 %v1937
    %2134 = vmatpush1.msra.mxu0 %v1936
    %2135 = vmatprep.subr.mxu0 %v1941
    %2136 = vmatpush1.msra.mxu0 %v1940
    %2137 = vmatprep.subr.mxu0 %v1945
    %2138 = vmatpush1.msra.mxu0 %v1944
    %2139 = vmatprep.subr.mxu0 %v1949
    %2140 = vmatpush1.msra.mxu0 %v1948
    %2141 = vmatprep.subr.mxu0 %v1953
    %2142 = vmatpush1.msra.mxu0 %v1952
    %2143 = vmatprep.subr.mxu0 %v1957
    %2144 = vmatpush1.msra.mxu0 %v1956
    %2145 = vmatprep.subr.mxu0 %v1961
    %2146 = vmatpush1.msra.mxu0 %v1960
    %2147 = vmatprep.subr.mxu0 %v1965
    %2148 = vmatpush1.msra.mxu0 %v1964
    %2149 = vmatprep.subr.mxu0 %v1969
    %2150 = vmatpush1.msra.mxu0 %v1968
    %2151 = vmatprep.subr.mxu0 %v1973
    %2152 = vmatpush1.msra.mxu0 %v1972
    %2153 = vmatprep.subr.mxu0 %v1977
    %2154 = vmatpush1.msra.mxu0 %v1976
    %2155 = vmatprep.subr.mxu0 %v1981
    %2156 = vmatpush1.msra.mxu0 %v1980
    %2157 = vmatprep.subr.mxu0 %v1985
    %2158 = vmatpush1.msra.mxu0 %v1984
    %2159 = vmatprep.subr.mxu0 %v1989
    %2160 = vmatpush1.msra.mxu0 %v1988
    %2161 = vmatprep.subr.mxu0 %v1993
    %2162 = vmatpush1.msra.mxu0 %v1992
    %2163 = vmatprep.subr.mxu0 %v1997
    %2164 = vmatpush1.msra.mxu0 %v1996
    %2165 = vmatprep.subr.mxu0 %v2001
    %2166 = vmatpush1.msra.mxu0 %v2000
    %2167 = vmatprep.subr.mxu0 %v2005
    %2168 = vmatpush1.msra.mxu0 %v2004
    %2169 = vmatprep.subr.mxu0 %v2009
    %2170 = vmatpush1.msra.mxu0 %v2008
    %2171 = vmatprep.subr.mxu0 %v2013
    %2172 = vmatpush1.msra.mxu0 %v2012
    %2173 = vmatprep.mubr.f32.mxu0 %v1759
    %2174 = vmatmul.mubr.f32.gmra.mrb[0].mxu0 %v1758
    %v2175 = vpop.f32.mrb[0].mxu0
    %v2176 = vadd.f32 %v2105, %v2175
    %v2177 = vpop.f32.mrb[0].mxu0
    %v2178 = vadd.f32 %v2107, %v2177
    %2179 = vdwg.mxu0
    %2180 = vmatprep.subr.mxu0 %v1763
    %2181 = vmatpush1.msra.mxu0 %v1762
    %2182 = vmatprep.subr.mxu0 %v1767
    %2183 = vmatpush1.msra.mxu0 %v1766
    %2184 = vmatprep.subr.mxu0 %v1771
    %2185 = vmatpush1.msra.mxu0 %v1770
    %2186 = vmatprep.subr.mxu0 %v1775
    %2187 = vmatpush1.msra.mxu0 %v1774
    %2188 = vmatprep.subr.mxu0 %v1779
    %2189 = vmatpush1.msra.mxu0 %v1778
    %2190 = vmatprep.subr.mxu0 %v1783
    %2191 = vmatpush1.msra.mxu0 %v1782
    %2192 = vmatprep.subr.mxu0 %v1787
    %2193 = vmatpush1.msra.mxu0 %v1786
    %2194 = vmatprep.subr.mxu0 %v1791
    %2195 = vmatpush1.msra.mxu0 %v1790
    %2196 = vmatprep.subr.mxu0 %v1795
    %2197 = vmatpush1.msra.mxu0 %v1794
    %2198 = vmatprep.subr.mxu0 %v1799
    %2199 = vmatpush1.msra.mxu0 %v1798
    %2200 = vmatprep.subr.mxu0 %v1803
    %2201 = vmatpush1.msra.mxu0 %v1802
    %2202 = vmatprep.subr.mxu0 %v1807
    %2203 = vmatpush1.msra.mxu0 %v1806
    %2204 = vmatprep.subr.mxu0 %v1811
    %2205 = vmatpush1.msra.mxu0 %v1810
    %2206 = vmatprep.subr.mxu0 %v1815
    %2207 = vmatpush1.msra.mxu0 %v1814
    %2208 = vmatprep.subr.mxu0 %v1819
    %2209 = vmatpush1.msra.mxu0 %v1818
    %2210 = vmatprep.subr.mxu0 %v1823
    %2211 = vmatpush1.msra.mxu0 %v1822
    %2212 = vmatprep.subr.mxu0 %v1827
    %2213 = vmatpush1.msra.mxu0 %v1826
    %2214 = vmatprep.subr.mxu0 %v1831
    %2215 = vmatpush1.msra.mxu0 %v1830
    %2216 = vmatprep.subr.mxu0 %v1835
    %2217 = vmatpush1.msra.mxu0 %v1834
    %2218 = vmatprep.subr.mxu0 %v1839
    %2219 = vmatpush1.msra.mxu0 %v1838
    %2220 = vmatprep.subr.mxu0 %v1843
    %2221 = vmatpush1.msra.mxu0 %v1842
    %2222 = vmatprep.subr.mxu0 %v1847
    %2223 = vmatpush1.msra.mxu0 %v1846
    %2224 = vmatprep.subr.mxu0 %v1851
    %2225 = vmatpush1.msra.mxu0 %v1850
    %2226 = vmatprep.subr.mxu0 %v1855
    %2227 = vmatpush1.msra.mxu0 %v1854
    %2228 = vmatprep.subr.mxu0 %v1859
    %2229 = vmatpush1.msra.mxu0 %v1858
    %2230 = vmatprep.subr.mxu0 %v1863
    %2231 = vmatpush1.msra.mxu0 %v1862
    %2232 = vmatprep.subr.mxu0 %v1867
    %2233 = vmatpush1.msra.mxu0 %v1866
    %2234 = vmatprep.subr.mxu0 %v1871
    %2235 = vmatpush1.msra.mxu0 %v1870
    %2236 = vmatprep.subr.mxu0 %v1875
    %2237 = vmatpush1.msra.mxu0 %v1874
    %2238 = vmatprep.subr.mxu0 %v1879
    %2239 = vmatpush1.msra.mxu0 %v1878
    %2240 = vmatprep.subr.mxu0 %v1883
    %2241 = vmatpush1.msra.mxu0 %v1882
    %2242 = vmatprep.subr.mxu0 %v1887
    %2243 = vmatpush1.msra.mxu0 %v1886
    %2244 = vmatprep.mubr.f32.mxu0 %v1757
    %2245 = vmatmul.mubr.f32.gmra.mrb[0].mxu0 %v1756
    %v2246 = vpop.f32.mrb[0].mxu0
    %v2247 = vadd.f32 %v2029, %v2246
    %v2248 = vpop.f32.mrb[0].mxu0
    %v2249 = vadd.f32 %v2033, %v2248
    %2250 = vdwg.mxu0
    %2251 = vmatprep.subr.mxu0 %v1891
    %2252 = vmatpush1.msra.mxu0 %v1890
    %2253 = vmatprep.subr.mxu0 %v1895
    %2254 = vmatpush1.msra.mxu0 %v1894
    %2255 = vmatprep.subr.mxu0 %v1899
    %2256 = vmatpush1.msra.mxu0 %v1898
    %2257 = vmatprep.subr.mxu0 %v1903
    %2258 = vmatpush1.msra.mxu0 %v1902
    %2259 = vmatprep.subr.mxu0 %v1907
    %2260 = vmatpush1.msra.mxu0 %v1906
    %2261 = vmatprep.subr.mxu0 %v1911
    %2262 = vmatpush1.msra.mxu0 %v1910
    %2263 = vmatprep.subr.mxu0 %v1915
    %2264 = vmatpush1.msra.mxu0 %v1914
    %2265 = vmatprep.subr.mxu0 %v1919
    %2266 = vmatpush1.msra.mxu0 %v1918
    %2267 = vmatprep.subr.mxu0 %v1923
    %2268 = vmatpush1.msra.mxu0 %v1922
    %2269 = vmatprep.subr.mxu0 %v1927
    %2270 = vmatpush1.msra.mxu0 %v1926
    %2271 = vmatprep.subr.mxu0 %v1931
    %2272 = vmatpush1.msra.mxu0 %v1930
    %2273 = vmatprep.subr.mxu0 %v1935
    %2274 = vmatpush1.msra.mxu0 %v1934
    %2275 = vmatprep.subr.mxu0 %v1939
    %2276 = vmatpush1.msra.mxu0 %v1938
    %2277 = vmatprep.subr.mxu0 %v1943
    %2278 = vmatpush1.msra.mxu0 %v1942
    %2279 = vmatprep.subr.mxu0 %v1947
    %2280 = vmatpush1.msra.mxu0 %v1946
    %2281 = vmatprep.subr.mxu0 %v1951
    %2282 = vmatpush1.msra.mxu0 %v1950
    %2283 = vmatprep.subr.mxu0 %v1955
    %2284 = vmatpush1.msra.mxu0 %v1954
    %2285 = vmatprep.subr.mxu0 %v1959
    %2286 = vmatpush1.msra.mxu0 %v1958
    %2287 = vmatprep.subr.mxu0 %v1963
    %2288 = vmatpush1.msra.mxu0 %v1962
    %2289 = vmatprep.subr.mxu0 %v1967
    %2290 = vmatpush1.msra.mxu0 %v1966
    %2291 = vmatprep.subr.mxu0 %v1971
    %2292 = vmatpush1.msra.mxu0 %v1970
    %2293 = vmatprep.subr.mxu0 %v1975
    %2294 = vmatpush1.msra.mxu0 %v1974
    %2295 = vmatprep.subr.mxu0 %v1979
    %2296 = vmatpush1.msra.mxu0 %v1978
    %2297 = vmatprep.subr.mxu0 %v1983
    %2298 = vmatpush1.msra.mxu0 %v1982
    %2299 = vmatprep.subr.mxu0 %v1987
    %2300 = vmatpush1.msra.mxu0 %v1986
    %2301 = vmatprep.subr.mxu0 %v1991
    %2302 = vmatpush1.msra.mxu0 %v1990
    %2303 = vmatprep.subr.mxu0 %v1995
    %2304 = vmatpush1.msra.mxu0 %v1994
    %2305 = vmatprep.subr.mxu0 %v1999
    %2306 = vmatpush1.msra.mxu0 %v1998
    %2307 = vmatprep.subr.mxu0 %v2003
    %2308 = vmatpush1.msra.mxu0 %v2002
    %2309 = vmatprep.subr.mxu0 %v2007
    %2310 = vmatpush1.msra.mxu0 %v2006
    %2311 = vmatprep.subr.mxu0 %v2011
    %2312 = vmatpush1.msra.mxu0 %v2010
    %2313 = vmatprep.subr.mxu0 %v2015
    %2314 = vmatpush1.msra.mxu0 %v2014
    %2315 = vmatprep.mubr.f32.mxu0 %v1759
    %2316 = vmatmul.mubr.f32.gmra.mrb[0].mxu0 %v1758
    %v2317 = vpop.f32.mrb[0].mxu0
    %v2318 = vadd.f32 %v2247, %v2317
    %v2319 = vpop.f32.mrb[0].mxu0
    %v2320 = vadd.f32 %v2249, %v2319
    %2321 = vdwg.mxu0
    %v2322 = vmax.f32 %v2176, 0.0
    %v2323 = vmax.f32 %v2178, 0.0
    %v2324 = vmax.f32 %v2318, 0.0
    %v2325 = vmax.f32 %v2320, 0.0
    %v2326 = vld [vmem:[#allocation14] sm:$0xff]
    %v2327 = vld [vmem:[#allocation14 + $0x8] sm:$0xff]
    %v2328 = vld [vmem:[#allocation14 + $0x10] sm:$0xff]
    %v2329 = vld [vmem:[#allocation14 + $0x18] sm:$0xff]
    %v2330 = vld [vmem:[#allocation14 + $0x20] sm:$0xff]
    %v2331 = vld [vmem:[#allocation14 + $0x28] sm:$0xff]
    %v2332 = vld [vmem:[#allocation14 + $0x30] sm:$0xff]
    %v2333 = vld [vmem:[#allocation14 + $0x38] sm:$0xff]
    %v2334 = vld [vmem:[#allocation14 + $0x40] sm:$0xff]
    %v2335 = vld [vmem:[#allocation14 + $0x48] sm:$0xff]
    %v2336 = vld [vmem:[#allocation14 + $0x50] sm:$0xff]
    %v2337 = vld [vmem:[#allocation14 + $0x58] sm:$0xff]
    %v2338 = vld [vmem:[#allocation14 + $0x60] sm:$0xff]
    %v2339 = vld [vmem:[#allocation14 + $0x68] sm:$0xff]
    %v2340 = vld [vmem:[#allocation14 + $0x70] sm:$0xff]
    %v2341 = vld [vmem:[#allocation14 + $0x78] sm:$0xff]
    %v2342 = vld [vmem:[#allocation14 + $0x80] sm:$0xff]
    %v2343 = vld [vmem:[#allocation14 + $0x88] sm:$0xff]
    %v2344 = vld [vmem:[#allocation14 + $0x90] sm:$0xff]
    %v2345 = vld [vmem:[#allocation14 + $0x98] sm:$0xff]
    %v2346 = vld [vmem:[#allocation14 + $0xa0] sm:$0xff]
    %v2347 = vld [vmem:[#allocation14 + $0xa8] sm:$0xff]
    %v2348 = vld [vmem:[#allocation14 + $0xb0] sm:$0xff]
    %v2349 = vld [vmem:[#allocation14 + $0xb8] sm:$0xff]
    %v2350 = vld [vmem:[#allocation14 + $0xc0] sm:$0xff]
    %v2351 = vld [vmem:[#allocation14 + $0xc8] sm:$0xff]
    %v2352 = vld [vmem:[#allocation14 + $0xd0] sm:$0xff]
    %v2353 = vld [vmem:[#allocation14 + $0xd8] sm:$0xff]
    %v2354 = vld [vmem:[#allocation14 + $0xe0] sm:$0xff]
    %v2355 = vld [vmem:[#allocation14 + $0xe8] sm:$0xff]
    %v2356 = vld [vmem:[#allocation14 + $0xf0] sm:$0xff]
    %v2357 = vld [vmem:[#allocation14 + $0xf8] sm:$0xff]
    %v2358 = vld [vmem:[#allocation14 + $0x100] sm:$0xff]
    %v2359 = vld [vmem:[#allocation14 + $0x108] sm:$0xff]
    %v2360 = vld [vmem:[#allocation14 + $0x110] sm:$0xff]
    %v2361 = vld [vmem:[#allocation14 + $0x118] sm:$0xff]
    %v2362 = vld [vmem:[#allocation14 + $0x120] sm:$0xff]
    %v2363 = vld [vmem:[#allocation14 + $0x128] sm:$0xff]
    %v2364 = vld [vmem:[#allocation14 + $0x130] sm:$0xff]
    %v2365 = vld [vmem:[#allocation14 + $0x138] sm:$0xff]
    %v2366 = vld [vmem:[#allocation14 + $0x140] sm:$0xff]
    %v2367 = vld [vmem:[#allocation14 + $0x148] sm:$0xff]
    %v2368 = vld [vmem:[#allocation14 + $0x150] sm:$0xff]
    %v2369 = vld [vmem:[#allocation14 + $0x158] sm:$0xff]
    %v2370 = vld [vmem:[#allocation14 + $0x160] sm:$0xff]
    %v2371 = vld [vmem:[#allocation14 + $0x168] sm:$0xff]
    %v2372 = vld [vmem:[#allocation14 + $0x170] sm:$0xff]
    %v2373 = vld [vmem:[#allocation14 + $0x178] sm:$0xff]
    %v2374 = vld [vmem:[#allocation14 + $0x180] sm:$0xff]
    %v2375 = vld [vmem:[#allocation14 + $0x188] sm:$0xff]
    %v2376 = vld [vmem:[#allocation14 + $0x190] sm:$0xff]
    %v2377 = vld [vmem:[#allocation14 + $0x198] sm:$0xff]
    %v2378 = vld [vmem:[#allocation14 + $0x1a0] sm:$0xff]
    %v2379 = vld [vmem:[#allocation14 + $0x1a8] sm:$0xff]
    %v2380 = vld [vmem:[#allocation14 + $0x1b0] sm:$0xff]
    %v2381 = vld [vmem:[#allocation14 + $0x1b8] sm:$0xff]
    %v2382 = vld [vmem:[#allocation14 + $0x1c0] sm:$0xff]
    %v2383 = vld [vmem:[#allocation14 + $0x1c8] sm:$0xff]
    %v2384 = vld [vmem:[#allocation14 + $0x1d0] sm:$0xff]
    %v2385 = vld [vmem:[#allocation14 + $0x1d8] sm:$0xff]
    %v2386 = vld [vmem:[#allocation14 + $0x1e0] sm:$0xff]
    %v2387 = vld [vmem:[#allocation14 + $0x1e8] sm:$0xff]
    %v2388 = vld [vmem:[#allocation14 + $0x1f0] sm:$0xff]
    %v2389 = vld [vmem:[#allocation14 + $0x1f8] sm:$0xff]
    %v2390 = vld [vmem:[#allocation16] sm:$0x1]
    %v2392 = vlaneseq
    %v2393 = vshrl.u32 %v2392, 7
    %v2394 = vsub.s32 0, %v2393
    %v2395 = vrot.slane %v2390, %v2394
    %2397 = vmatprep.subr.mxu0 0.0
    %2398 = vmatpush1.msra.mxu0 %v2326
    %2399 = vmatprep.subr.mxu0 0.0
    %2400 = vmatpush1.msra.mxu0 %v2327
    %2401 = vmatprep.subr.mxu0 0.0
    %2402 = vmatpush1.msra.mxu0 %v2328
    %2403 = vmatprep.subr.mxu0 0.0
    %2404 = vmatpush1.msra.mxu0 %v2329
    %2405 = vmatprep.subr.mxu0 0.0
    %2406 = vmatpush1.msra.mxu0 %v2330
    %2407 = vmatprep.subr.mxu0 0.0
    %2408 = vmatpush1.msra.mxu0 %v2331
    %2409 = vmatprep.subr.mxu0 0.0
    %2410 = vmatpush1.msra.mxu0 %v2332
    %2411 = vmatprep.subr.mxu0 0.0
    %2412 = vmatpush1.msra.mxu0 %v2333
    %2413 = vmatprep.subr.mxu0 0.0
    %2414 = vmatpush1.msra.mxu0 %v2334
    %2415 = vmatprep.subr.mxu0 0.0
    %2416 = vmatpush1.msra.mxu0 %v2335
    %2417 = vmatprep.subr.mxu0 0.0
    %2418 = vmatpush1.msra.mxu0 %v2336
    %2419 = vmatprep.subr.mxu0 0.0
    %2420 = vmatpush1.msra.mxu0 %v2337
    %2421 = vmatprep.subr.mxu0 0.0
    %2422 = vmatpush1.msra.mxu0 %v2338
    %2423 = vmatprep.subr.mxu0 0.0
    %2424 = vmatpush1.msra.mxu0 %v2339
    %2425 = vmatprep.subr.mxu0 0.0
    %2426 = vmatpush1.msra.mxu0 %v2340
    %2427 = vmatprep.subr.mxu0 0.0
    %2428 = vmatpush1.msra.mxu0 %v2341
    %2429 = vmatprep.subr.mxu0 0.0
    %2430 = vmatpush1.msra.mxu0 %v2342
    %2431 = vmatprep.subr.mxu0 0.0
    %2432 = vmatpush1.msra.mxu0 %v2343
    %2433 = vmatprep.subr.mxu0 0.0
    %2434 = vmatpush1.msra.mxu0 %v2344
    %2435 = vmatprep.subr.mxu0 0.0
    %2436 = vmatpush1.msra.mxu0 %v2345
    %2437 = vmatprep.subr.mxu0 0.0
    %2438 = vmatpush1.msra.mxu0 %v2346
    %2439 = vmatprep.subr.mxu0 0.0
    %2440 = vmatpush1.msra.mxu0 %v2347
    %2441 = vmatprep.subr.mxu0 0.0
    %2442 = vmatpush1.msra.mxu0 %v2348
    %2443 = vmatprep.subr.mxu0 0.0
    %2444 = vmatpush1.msra.mxu0 %v2349
    %2445 = vmatprep.subr.mxu0 0.0
    %2446 = vmatpush1.msra.mxu0 %v2350
    %2447 = vmatprep.subr.mxu0 0.0
    %2448 = vmatpush1.msra.mxu0 %v2351
    %2449 = vmatprep.subr.mxu0 0.0
    %2450 = vmatpush1.msra.mxu0 %v2352
    %2451 = vmatprep.subr.mxu0 0.0
    %2452 = vmatpush1.msra.mxu0 %v2353
    %2453 = vmatprep.subr.mxu0 0.0
    %2454 = vmatpush1.msra.mxu0 %v2354
    %2455 = vmatprep.subr.mxu0 0.0
    %2456 = vmatpush1.msra.mxu0 %v2355
    %2457 = vmatprep.subr.mxu0 0.0
    %2458 = vmatpush1.msra.mxu0 %v2356
    %2459 = vmatprep.subr.mxu0 0.0
    %2460 = vmatpush1.msra.mxu0 %v2357
    %2461 = vmatprep.mubr.f32.mxu0 %v2323
    %2462 = vmatmul.mubr.f32.gmra.mrb[0].mxu0 %v2322
    %v2463 = vpop.f32.mrb[0].mxu0
    %v2464 = vadd.f32 %v2395, %v2463
    %v2465 = vpop.f32.mrb[0].mxu0
    %2466 = vdwg.mxu0
    %2467 = vmatprep.subr.mxu0 0.0
    %2468 = vmatpush1.msra.mxu0 %v2358
    %2469 = vmatprep.subr.mxu0 0.0
    %2470 = vmatpush1.msra.mxu0 %v2359
    %2471 = vmatprep.subr.mxu0 0.0
    %2472 = vmatpush1.msra.mxu0 %v2360
    %2473 = vmatprep.subr.mxu0 0.0
    %2474 = vmatpush1.msra.mxu0 %v2361
    %2475 = vmatprep.subr.mxu0 0.0
    %2476 = vmatpush1.msra.mxu0 %v2362
    %2477 = vmatprep.subr.mxu0 0.0
    %2478 = vmatpush1.msra.mxu0 %v2363
    %2479 = vmatprep.subr.mxu0 0.0
    %2480 = vmatpush1.msra.mxu0 %v2364
    %2481 = vmatprep.subr.mxu0 0.0
    %2482 = vmatpush1.msra.mxu0 %v2365
    %2483 = vmatprep.subr.mxu0 0.0
    %2484 = vmatpush1.msra.mxu0 %v2366
    %2485 = vmatprep.subr.mxu0 0.0
    %2486 = vmatpush1.msra.mxu0 %v2367
    %2487 = vmatprep.subr.mxu0 0.0
    %2488 = vmatpush1.msra.mxu0 %v2368
    %2489 = vmatprep.subr.mxu0 0.0
    %2490 = vmatpush1.msra.mxu0 %v2369
    %2491 = vmatprep.subr.mxu0 0.0
    %2492 = vmatpush1.msra.mxu0 %v2370
    %2493 = vmatprep.subr.mxu0 0.0
    %2494 = vmatpush1.msra.mxu0 %v2371
    %2495 = vmatprep.subr.mxu0 0.0
    %2496 = vmatpush1.msra.mxu0 %v2372
    %2497 = vmatprep.subr.mxu0 0.0
    %2498 = vmatpush1.msra.mxu0 %v2373
    %2499 = vmatprep.subr.mxu0 0.0
    %2500 = vmatpush1.msra.mxu0 %v2374
    %2501 = vmatprep.subr.mxu0 0.0
    %2502 = vmatpush1.msra.mxu0 %v2375
    %2503 = vmatprep.subr.mxu0 0.0
    %2504 = vmatpush1.msra.mxu0 %v2376
    %2505 = vmatprep.subr.mxu0 0.0
    %2506 = vmatpush1.msra.mxu0 %v2377
    %2507 = vmatprep.subr.mxu0 0.0
    %2508 = vmatpush1.msra.mxu0 %v2378
    %2509 = vmatprep.subr.mxu0 0.0
    %2510 = vmatpush1.msra.mxu0 %v2379
    %2511 = vmatprep.subr.mxu0 0.0
    %2512 = vmatpush1.msra.mxu0 %v2380
    %2513 = vmatprep.subr.mxu0 0.0
    %2514 = vmatpush1.msra.mxu0 %v2381
    %2515 = vmatprep.subr.mxu0 0.0
    %2516 = vmatpush1.msra.mxu0 %v2382
    %2517 = vmatprep.subr.mxu0 0.0
    %2518 = vmatpush1.msra.mxu0 %v2383
    %2519 = vmatprep.subr.mxu0 0.0
    %2520 = vmatpush1.msra.mxu0 %v2384
    %2521 = vmatprep.subr.mxu0 0.0
    %2522 = vmatpush1.msra.mxu0 %v2385
    %2523 = vmatprep.subr.mxu0 0.0
    %2524 = vmatpush1.msra.mxu0 %v2386
    %2525 = vmatprep.subr.mxu0 0.0
    %2526 = vmatpush1.msra.mxu0 %v2387
    %2527 = vmatprep.subr.mxu0 0.0
    %2528 = vmatpush1.msra.mxu0 %v2388
    %2529 = vmatprep.subr.mxu0 0.0
    %2530 = vmatpush1.msra.mxu0 %v2389
    %2531 = vmatprep.mubr.f32.mxu0 %v2325
    %2532 = vmatmul.mubr.f32.gmra.mrb[0].mxu0 %v2324
    %v2533 = vpop.f32.mrb[0].mxu0
    %v2534 = vadd.f32 %v2464, %v2533
    %v2535 = vpop.f32.mrb[0].mxu0
    %2536 = vdwg.mxu0
    %v2537 = vmax.f32 %v2534, 0.0
    %2538 = vst [vmem:[#allocation17] sm:$0xff] %v2537
    // Predicated region
    $region74: #{tpu_custom_call.1} parent=1 // pred_check
      _
    $region75: #{tpu_custom_call.1} parent=1 // pred_check_branch
      %2540 = sbr.rel (0) target = $region77
    $region76: #{tpu_custom_call.1} parent=1 // pred_region
      %s2542 = ssub.s32 128, 128
      %2543 = vsyncadd [#allocation4], %s2542
      %s2545 = sshll.u32 [#allocation17], 4
      %s2546 = int_to_ptr.vmem [resolvable:$true] %s2545
      %2548 = dma.vmem_to_hbm [thread:$0]  %s2546, 128, %s9, [#allocation4]
    $region77: #{tpu_custom_call.1} parent=1 // pred_fallthru
      _
    // Predicated region
    $region78: #{tpu_custom_call.1} parent=1 // pred_check
      _
    $region79: #{tpu_custom_call.1} parent=1 // pred_check_branch
      %2550 = sbr.rel (0) target = $region81
    $region80: #{tpu_custom_call.1} parent=1 // pred_region
      %2551 = dma.done [#allocation4], 128
    $region81: #{tpu_custom_call.1} parent=1 // pred_fallthru
      _
    %2552 = vsyncpa [#allocation3], 1
    %2553 = vsyncpa [#allocation6], 1
    %2554 = vsyncpa [#allocation9], 1
    %2555 = vsyncpa [#allocation12], 1
    %2556 = vsyncpa [#allocation15], 1
    %2557 = vsyncpa [#allocation4], 1

</llo_original>
